<compile_context>
chip_gen: v7x
topology: tpu7x:2x2x1
jax: 0.10.0
libtpu: 0.0.40
codegen_flags: <defaults>
</compile_context>

<pallas_src>
import functools

import jax
import jax.numpy as jnp
from jax.experimental import pallas as pl
from jax.experimental.pallas import tpu as pltpu

EPS_PAD = 128  # eps occupies its own full 128-lane tile on the packed input slab


def _round_up(n, m):
    return ((n + m - 1) // m) * m


# ----------------------------- Pallas kernel --------------------------------
def vae_forward_kernel(
    xin_ref,     # [TB, X + EPS_PAD]  = [ x | eps | 0-pad ]
    w_enc_ref,   # [X, H]    encoder.features[0].weight^T
    w_head_ref,  # [H, 2Z]   [fc1.weight^T | fc2.weight^T]  (fused mu/logvar head)
    w_d1_ref,    # [Z, H]    decoder[0].weight^T
    w_d2_ref,    # [H, X]    decoder[2].weight^T
    b_ref,       # [4, maxW] packed biases (rows: enc | head | dec1 | dec2), zero padded
    xrec_ref,    # out [TB, X]
    small_ref,   # out [TB, PACK_W]  = [mu | logvar | z | 0-pad]  (lane-dense slab)
    *,
    X, Z,
):
    H = w_enc_ref.shape[1]

    x = xin_ref[:, :X]            # [TB, X]
    eps = xin_ref[:, X:X + Z]     # [TB, Z]  (from the lane-dense packed slab)

    b_enc = b_ref[0:1, :H]
    b_head = b_ref[1:2, :2 * Z]
    b_d1 = b_ref[2:3, :H]
    b_d2 = b_ref[3:4, :X]

    # --- Encoder: Linear(X->H) + ReLU ------------------------------------
    h = jnp.dot(x, w_enc_ref[...], preferred_element_type=jnp.float32)
    h = jnp.maximum(h + b_enc, 0.0)

    # --- Fused bottleneck heads: [mu | logvar] in one MXU pass ------------
    head = jnp.dot(h, w_head_ref[...], preferred_element_type=jnp.float32) + b_head
    mu = head[:, :Z]
    logvar = head[:, Z:2 * Z]

    # --- Reparameterization: z = mu + eps * exp(0.5 * logvar) -------------
    z = mu + eps * jnp.exp(0.5 * logvar)

    # --- Decoder: Linear(Z->H) + ReLU, Linear(H->X) + Sigmoid -------------
    hd = jnp.dot(z, w_d1_ref[...], preferred_element_type=jnp.float32)
    hd = jnp.maximum(hd + b_d1, 0.0)
    logits = jnp.dot(hd, w_d2_ref[...], preferred_element_type=jnp.float32) + b_d2
    # exact sigmoid; divide goes through the reciprocal path (EUP has slack here)
    xrec_ref[...] = pl.reciprocal(1.0 + jnp.exp(-logits), approx=False)

    # --- Packed small outputs: zero the slab, then slice-store ------------
    # (no concatenate -> no lane rotates/selects; HBM writeback stays lane-dense)
    small_ref[...] = jnp.zeros_like(small_ref)
    small_ref[:, :2 * Z] = head          # [mu | logvar], already contiguous
    small_ref[:, 2 * Z:3 * Z] = z


# ------------------------------ Wrapper --------------------------------------
def _num_tensorcores_per_chip():
    """2 on v7x (megacore sharding pays off), 1 on v5e/v6e/others."""
    try:
        kind = jax.devices()[0].device_kind.lower()
    except Exception:
        return 1
    return 2 if ("v7" in kind or "7x" in kind) else 1


def _pick_batch_tile(B, n_tc):
    """
    v5e/v6e (single TC): one big block (grid=(1,)) -> no per-step grid overhead.
    v7x (2 TCs): pick TB so the grid has an even number (>=2) of steps so both
    TensorCores get work under dimension_semantics=("parallel",).
    """
    if n_tc >= 2 and B >= 16:
        for tb in (128, 64, 32, 16, 8):
            if tb <= B // 2 and B % (2 * tb) == 0:
                return tb
    return B


def pack_params(params):
    """One-time host-side repack into the fused/packed kernel layout."""
    X, H = params["w_enc"].shape
    Z = params["w_mu"].shape[1]
    maxw = max(X, H, 2 * Z)

    def row(b):
        b = b.reshape(1, -1)
        return jnp.pad(b, ((0, 0), (0, maxw - b.shape[1])))

    return {
        "w_enc": params["w_enc"],
        "w_head": jnp.concatenate([params["w_mu"], params["w_lv"]], axis=1),  # [H, 2Z]
        "w_d1": params["w_d1"],
        "w_d2": params["w_d2"],
        "b_pack": jnp.concatenate(
            [
                row(params["b_enc"]),
                row(jnp.concatenate([params["b_mu"], params["b_lv"]], axis=1)),
                row(params["b_d1"]),
                row(params["b_d2"]),
            ],
            axis=0,
        ),  # [4, maxw]
    }


def vae_forward(x, kp, eps):
    B, X = x.shape
    Z = eps.shape[1]
    H = kp["w_enc"].shape[1]
    maxw = kp["b_pack"].shape[1]
    pack_w = max(128, _round_up(3 * Z, 128))  # lane-dense small-output width

    # Lane-dense packed input slab: [ x | eps padded to a full 128-lane tile ].
    # Removes one input DMA per grid step and makes the eps read fully coalesced.
    eps_pad = jnp.zeros((B, EPS_PAD), jnp.float32).at[:, :Z].set(eps)
    x_packed = jnp.concatenate([x, eps_pad], axis=1)  # [B, X + 128]
    XP = X + EPS_PAD

    n_tc = _num_tensorcores_per_chip()
    TB = _pick_batch_tile(B, n_tc)
    grid = (B // TB,)

    def batch_spec(shape):
        return pl.BlockSpec(shape, lambda i: (i, 0))

    def const_spec(shape):  # weights/biases stay resident across grid steps
        return pl.BlockSpec(shape, lambda i: (0, 0))

    in_specs = [
        batch_spec((TB, XP)),       # packed [x | eps]
        const_spec((X, H)),         # w_enc
        const_spec((H, 2 * Z)),     # w_head
        const_spec((Z, H)),         # w_d1
        const_spec((H, X)),         # w_d2
        const_spec((4, maxw)),      # b_pack
    ]
    out_specs = (
        batch_spec((TB, X)),        # x_recon
        batch_spec((TB, pack_w)),   # packed [mu | logvar | z | pad]
    )
    out_shape = (
        jax.ShapeDtypeStruct((B, X), jnp.float32),
        jax.ShapeDtypeStruct((B, pack_w), jnp.float32),
    )

    kernel = functools.partial(vae_forward_kernel, X=X, Z=Z)

    x_recon, packed = pl.pallas_call(
        kernel,
        grid=grid,
        in_specs=in_specs,
        out_specs=out_specs,
        out_shape=out_shape,
        compiler_params=pltpu.CompilerParams(
            dimension_semantics=("parallel",),  # batch axis -> both TCs on v7x
        ),
    )(x_packed, kp["w_enc"], kp["w_head"], kp["w_d1"], kp["w_d2"], kp["b_pack"])

    # TODO(synk): downstream code that can consume the packed [B,128] slab directly
    # should take `packed` as-is and skip these three tiny HBM-copy slices.
    mu = packed[:, :Z]
    logvar = packed[:, Z:2 * Z]
    z = packed[:, 2 * Z:3 * Z]
    return x_recon, mu, logvar, z


# ------------------------- Deterministic params -------------------------------
def init_params(key, x_dim, hidden, z_dim):
    ks = jax.random.split(key, 6)
    scale = 0.05

    def lin(k, fan_in, fan_out):
        return scale * jax.random.normal(k, (fan_in, fan_out), jnp.float32)

    return {
        "w_enc": lin(ks[0], x_dim, hidden),
        "b_enc": jnp.zeros((1, hidden), jnp.float32),
        "w_mu":  lin(ks[1], hidden, z_dim),
        "b_mu":  jnp.zeros((1, z_dim), jnp.float32),
        "w_lv":  lin(ks[2], hidden, z_dim),
        "b_lv":  jnp.zeros((1, z_dim), jnp.float32),
        "w_d1":  lin(ks[3], z_dim, hidden),
        "b_d1":  jnp.zeros((1, hidden), jnp.float32),
        "w_d2":  lin(ks[4], hidden, x_dim),
        "b_d2":  jnp.zeros((1, x_dim), jnp.float32),
    }


# ------------------------------ Reference ------------------------------------
def vae_forward_ref(x, p, eps):
    h = jnp.maximum(x @ p["w_enc"] + p["b_enc"], 0.0)
    mu = h @ p["w_mu"] + p["b_mu"]
    logvar = h @ p["w_lv"] + p["b_lv"]
    z = mu + eps * jnp.exp(0.5 * logvar)
    hd = jnp.maximum(z @ p["w_d1"] + p["b_d1"], 0.0)
    x_recon = jax.nn.sigmoid(hd @ p["w_d2"] + p["b_d2"])
    return x_recon, mu, logvar, z


# -------------------------------- Main ----------------------------------------
if __name__ == "__main__":
    # B=256: on v5e/v6e this is one grid step (TB=256); on v7x it splits into an
    # even grid of two 128-row steps so both TensorCores are used.
    B, X_DIM, HIDDEN, Z_DIM = 256, 256, 128, 16

    key = jax.random.PRNGKey(0)
    k_x, k_eps, k_p = jax.random.split(key, 3)

    x = jax.random.uniform(k_x, (B, X_DIM), jnp.float32)       # image-like input
    eps = jax.random.normal(k_eps, (B, Z_DIM), jnp.float32)    # torch.randn_like(std)
    params = init_params(k_p, X_DIM, HIDDEN, Z_DIM)
    kparams = pack_params(params)                              # one-time repack

    x_recon, mu, logvar, z = jax.block_until_ready(vae_forward(x, kparams, eps))

    # correctness check against plain-JAX reference (unpacked params)
    r_recon, r_mu, r_lv, r_z = vae_forward_ref(x, params, eps)
    assert jnp.allclose(x_recon, r_recon, atol=1e-5, rtol=1e-5)
    assert jnp.allclose(mu, r_mu, atol=1e-5, rtol=1e-5)
    assert jnp.allclose(logvar, r_lv, atol=1e-5, rtol=1e-5)
    assert jnp.allclose(z, r_z, atol=1e-5, rtol=1e-5)

    print("KERNEL_OK")
</pallas_src>

<mosaic_0001>
module attributes {stable_mosaic.version = 11 : i64} {
  func.func @vae_forward_kernel(%arg0: i32, %arg1: memref<256x384xf32, #tpu.memory_space<vmem>>, %arg2: memref<256x128xf32, #tpu.memory_space<vmem>>, %arg3: memref<128x32xf32, #tpu.memory_space<vmem>>, %arg4: memref<16x128xf32, #tpu.memory_space<vmem>>, %arg5: memref<128x256xf32, #tpu.memory_space<vmem>>, %arg6: memref<4x256xf32, #tpu.memory_space<vmem>>, %arg7: memref<256x256xf32, #tpu.memory_space<vmem>>, %arg8: memref<256x128xf32, #tpu.memory_space<vmem>>) attributes {dimension_semantics = [#tpu.dimension_semantics<parallel>], iteration_bounds = array<i64: 1>, scalar_prefetch = 0 : i64, scratch_operands = 0 : i64, tpu.core_type = #tpu.core_type<tc>, window_params = [{transform_indices = @transform_0, window_bounds = array<i64: 256, 384>}, {pipeline_mode = #tpu.pipeline_mode<synchronous>, transform_indices = @transform_1, window_bounds = array<i64: 256, 128>}, {pipeline_mode = #tpu.pipeline_mode<synchronous>, transform_indices = @transform_2, window_bounds = array<i64: 128, 32>}, {pipeline_mode = #tpu.pipeline_mode<synchronous>, transform_indices = @transform_3, window_bounds = array<i64: 16, 128>}, {pipeline_mode = #tpu.pipeline_mode<synchronous>, transform_indices = @transform_4, window_bounds = array<i64: 128, 256>}, {pipeline_mode = #tpu.pipeline_mode<synchronous>, transform_indices = @transform_5, window_bounds = array<i64: 4, 256>}, {transform_indices = @transform_6, window_bounds = array<i64: 256, 256>}, {transform_indices = @transform_7, window_bounds = array<i64: 256, 128>}]} {
    %c0 = arith.constant 0 : index
    %c0_0 = arith.constant 0 : index
    %0 = vector.load %arg1[%c0, %c0_0] : memref<256x384xf32, #tpu.memory_space<vmem>>, vector<256x256xf32>
    %c0_1 = arith.constant 0 : index
    %c256 = arith.constant 256 : index
    %1 = vector.load %arg1[%c0_1, %c256] : memref<256x384xf32, #tpu.memory_space<vmem>>, vector<256x16xf32>
    %c0_2 = arith.constant 0 : index
    %c0_3 = arith.constant 0 : index
    %2 = vector.load %arg6[%c0_2, %c0_3] : memref<4x256xf32, #tpu.memory_space<vmem>>, vector<1x128xf32>
    %c1 = arith.constant 1 : index
    %c0_4 = arith.constant 0 : index
    %3 = vector.load %arg6[%c1, %c0_4] : memref<4x256xf32, #tpu.memory_space<vmem>>, vector<1x32xf32>
    %c2 = arith.constant 2 : index
    %c0_5 = arith.constant 0 : index
    %4 = vector.load %arg6[%c2, %c0_5] : memref<4x256xf32, #tpu.memory_space<vmem>>, vector<1x128xf32>
    %c3 = arith.constant 3 : index
    %c0_6 = arith.constant 0 : index
    %5 = vector.load %arg6[%c3, %c0_6] : memref<4x256xf32, #tpu.memory_space<vmem>>, vector<1x256xf32>
    %c0_7 = arith.constant 0 : index
    %c0_8 = arith.constant 0 : index
    %6 = vector.load %arg2[%c0_7, %c0_8] : memref<256x128xf32, #tpu.memory_space<vmem>>, vector<256x128xf32>
    %cst = arith.constant dense<0.000000e+00> : vector<256x128xf32>
    %7 = tpu.matmul %0, %6, %cst {dimension_numbers = #tpu.dot_dimension_numbers<[1], [0], [0], [1], [0, 0, 1, 1], [], []>} : vector<256x256xf32>, vector<256x128xf32>, vector<256x128xf32> -> vector<256x128xf32>
    %8 = vector.broadcast %2 : vector<1x128xf32> to vector<256x128xf32>
    %9 = arith.addf %7, %8 : vector<256x128xf32>
    %cst_9 = arith.constant 0.000000e+00 : f32
    %10 = vector.broadcast %cst_9 : f32 to vector<256x128xf32>
    %11 = arith.maximumf %9, %10 : vector<256x128xf32>
    %c0_10 = arith.constant 0 : index
    %c0_11 = arith.constant 0 : index
    %12 = vector.load %arg3[%c0_10, %c0_11] : memref<128x32xf32, #tpu.memory_space<vmem>>, vector<128x32xf32>
    %cst_12 = arith.constant dense<0.000000e+00> : vector<256x32xf32>
    %13 = tpu.matmul %11, %12, %cst_12 {dimension_numbers = #tpu.dot_dimension_numbers<[1], [0], [0], [1], [0, 0, 1, 1], [], []>} : vector<256x128xf32>, vector<128x32xf32>, vector<256x32xf32> -> vector<256x32xf32>
    %14 = vector.broadcast %3 : vector<1x32xf32> to vector<256x32xf32>
    %15 = arith.addf %13, %14 : vector<256x32xf32>
    %16 = vector.extract_strided_slice %15 {offsets = [0, 0], sizes = [256, 16], strides = [1, 1]} : vector<256x32xf32> to vector<256x16xf32>
    %17 = vector.extract_strided_slice %15 {offsets = [0, 16], sizes = [256, 16], strides = [1, 1]} : vector<256x32xf32> to vector<256x16xf32>
    %cst_13 = arith.constant 5.000000e-01 : f32
    %18 = vector.broadcast %cst_13 : f32 to vector<256x16xf32>
    %19 = arith.mulf %18, %17 : vector<256x16xf32>
    %20 = math.exp %19 : vector<256x16xf32>
    %21 = arith.mulf %1, %20 : vector<256x16xf32>
    %22 = arith.addf %16, %21 : vector<256x16xf32>
    %c0_14 = arith.constant 0 : index
    %c0_15 = arith.constant 0 : index
    %23 = vector.load %arg4[%c0_14, %c0_15] : memref<16x128xf32, #tpu.memory_space<vmem>>, vector<16x128xf32>
    %cst_16 = arith.constant dense<0.000000e+00> : vector<256x128xf32>
    %24 = tpu.matmul %22, %23, %cst_16 {dimension_numbers = #tpu.dot_dimension_numbers<[1], [0], [0], [1], [0, 0, 1, 1], [], []>} : vector<256x16xf32>, vector<16x128xf32>, vector<256x128xf32> -> vector<256x128xf32>
    %25 = vector.broadcast %4 : vector<1x128xf32> to vector<256x128xf32>
    %26 = arith.addf %24, %25 : vector<256x128xf32>
    %cst_17 = arith.constant 0.000000e+00 : f32
    %27 = vector.broadcast %cst_17 : f32 to vector<256x128xf32>
    %28 = arith.maximumf %26, %27 : vector<256x128xf32>
    %c0_18 = arith.constant 0 : index
    %c0_19 = arith.constant 0 : index
    %29 = vector.load %arg5[%c0_18, %c0_19] : memref<128x256xf32, #tpu.memory_space<vmem>>, vector<128x256xf32>
    %cst_20 = arith.constant dense<0.000000e+00> : vector<256x256xf32>
    %30 = tpu.matmul %28, %29, %cst_20 {dimension_numbers = #tpu.dot_dimension_numbers<[1], [0], [0], [1], [0, 0, 1, 1], [], []>} : vector<256x128xf32>, vector<128x256xf32>, vector<256x256xf32> -> vector<256x256xf32>
    %31 = vector.broadcast %5 : vector<1x256xf32> to vector<256x256xf32>
    %32 = arith.addf %30, %31 : vector<256x256xf32>
    %cst_21 = arith.constant 0.000000e+00 : f32
    %33 = vector.broadcast %cst_21 : f32 to vector<256x256xf32>
    %34 = arith.subf %33, %32 : vector<256x256xf32>
    %35 = math.exp %34 : vector<256x256xf32>
    %cst_22 = arith.constant 1.000000e+00 : f32
    %36 = vector.broadcast %cst_22 : f32 to vector<256x256xf32>
    %37 = arith.addf %36, %35 : vector<256x256xf32>
    %38 = tpu.reciprocal %37 : vector<256x256xf32> -> vector<256x256xf32>
    %c0_23 = arith.constant 0 : index
    %c0_24 = arith.constant 0 : index
    %39 = vector.load %arg7[%c0_23, %c0_24] : memref<256x256xf32, #tpu.memory_space<vmem>>, vector<256x256xf32>
    tpu.vector_store %arg7[%c0_23, %c0_24], %38 {strides = array<i32>} : memref<256x256xf32, #tpu.memory_space<vmem>>, vector<256x256xf32>,
    %cst_25 = arith.constant 0.000000e+00 : f32
    %40 = vector.broadcast %cst_25 : f32 to vector<256x128xf32>
    %c0_26 = arith.constant 0 : index
    %c0_27 = arith.constant 0 : index
    %41 = vector.load %arg8[%c0_26, %c0_27] : memref<256x128xf32, #tpu.memory_space<vmem>>, vector<256x128xf32>
    tpu.vector_store %arg8[%c0_26, %c0_27], %40 {strides = array<i32>} : memref<256x128xf32, #tpu.memory_space<vmem>>, vector<256x128xf32>,
    %c0_28 = arith.constant 0 : index
    %c0_29 = arith.constant 0 : index
    %42 = vector.load %arg8[%c0_28, %c0_29] : memref<256x128xf32, #tpu.memory_space<vmem>>, vector<256x32xf32>
    tpu.vector_store %arg8[%c0_28, %c0_29], %15 {strides = array<i32>} : memref<256x128xf32, #tpu.memory_space<vmem>>, vector<256x32xf32>,
    %c0_30 = arith.constant 0 : index
    %c32 = arith.constant 32 : index
    %43 = vector.load %arg8[%c0_30, %c32] : memref<256x128xf32, #tpu.memory_space<vmem>>, vector<256x16xf32>
    tpu.vector_store %arg8[%c0_30, %c32], %22 {strides = array<i32>} : memref<256x128xf32, #tpu.memory_space<vmem>>, vector<256x16xf32>,
    return
  }
  func.func @transform_0(%arg0: i32) -> (i32, i32) {
    %c0_i32 = arith.constant 0 : i32
    %c0_i32_0 = arith.constant 0 : i32
    return %arg0, %c0_i32 : i32, i32
  }
  func.func @transform_1(%arg0: i32) -> (i32, i32) {
    %c0_i32 = arith.constant 0 : i32
    %c0_i32_0 = arith.constant 0 : i32
    %c0_i32_1 = arith.constant 0 : i32
    return %c0_i32, %c0_i32_0 : i32, i32
  }
  func.func @transform_2(%arg0: i32) -> (i32, i32) {
    %c0_i32 = arith.constant 0 : i32
    %c0_i32_0 = arith.constant 0 : i32
    %c0_i32_1 = arith.constant 0 : i32
    return %c0_i32, %c0_i32_0 : i32, i32
  }
  func.func @transform_3(%arg0: i32) -> (i32, i32) {
    %c0_i32 = arith.constant 0 : i32
    %c0_i32_0 = arith.constant 0 : i32
    %c0_i32_1 = arith.constant 0 : i32
    return %c0_i32, %c0_i32_0 : i32, i32
  }
  func.func @transform_4(%arg0: i32) -> (i32, i32) {
    %c0_i32 = arith.constant 0 : i32
    %c0_i32_0 = arith.constant 0 : i32
    %c0_i32_1 = arith.constant 0 : i32
    return %c0_i32, %c0_i32_0 : i32, i32
  }
  func.func @transform_5(%arg0: i32) -> (i32, i32) {
    %c0_i32 = arith.constant 0 : i32
    %c0_i32_0 = arith.constant 0 : i32
    %c0_i32_1 = arith.constant 0 : i32
    return %c0_i32, %c0_i32_0 : i32, i32
  }
  func.func @transform_6(%arg0: i32) -> (i32, i32) {
    %c0_i32 = arith.constant 0 : i32
    %c0_i32_0 = arith.constant 0 : i32
    return %arg0, %c0_i32 : i32, i32
  }
  func.func @transform_7(%arg0: i32) -> (i32, i32) {
    %c0_i32 = arith.constant 0 : i32
    %c0_i32_0 = arith.constant 0 : i32
    return %arg0, %c0_i32 : i32, i32
  }
}

</mosaic_0001>

<llo_original>
// kernel: tpu_custom_call.1
$region0: #{tpu_custom_call.1}
  #allocation0 [shape = 'u32[]', space=smem, size = 0x4, offset = 0x4, fixed_abs, tag = 'smem constant byte address 0x4 - core index']
  #allocation1 [shape = 'u32[144,128]{1,0:T(1,128)}', space=vmem, size = 0x12000, scoped, tag = 'internal scratch']
  %s0 = inlined_call_operand.hbm [shape: f32[256,384], index: 0, kind: input, shape index: {}]
  %s1 = inlined_call_operand.hbm [shape: f32[256,128], index: 1, kind: input, shape index: {}]
  %s2 = inlined_call_operand.vmem [shape: f32[128,32], index: 2, kind: input, shape index: {}]
  %s3 = inlined_call_operand.vmem [shape: f32[16,128], index: 3, kind: input, shape index: {}]
  %s4 = inlined_call_operand.hbm [shape: f32[128,256], index: 4, kind: input, shape index: {}]
  %s5 = inlined_call_operand.vmem [shape: f32[4,256], index: 5, kind: input, shape index: {}]
  %s6 = inlined_call_operand.hbm [shape: f32[256,256], index: 6, kind: output, shape index: {0}]
  %s7 = inlined_call_operand.hbm [shape: f32[256,128], index: 7, kind: output, shape index: {1}]
  %8 = xla_tuple %s6, %s7
  %s9 = sld [smem:[#allocation0]]
  $region54: #{tpu_custom_call.1} parent=0
    _
  %s11 = ssub.s32 1, %s9
  %s12 = scalar_select 0, %s11, %s9
  $region1: #{tpu_custom_call.1} parent=0
    #allocation2 [shape = 'u8[393216]{0}', space=vmem, size = 0x60000, scoped, tag = 'input window, operand 0, single buffered']
    #allocation3 [shape = 's32[1]{0}', space=sflag, size = 0x4, scoped, tag = 'scoped memory for tpu_custom_call.1']
    #allocation4 [shape = 's32[1]{0}', space=sflag, size = 0x4, scoped, tag = 'scoped memory for tpu_custom_call.1']
    #allocation5 [shape = 'u8[131072]{0}', space=vmem, size = 0x20000, scoped, tag = 'input window, operand 1, single buffered']
    #allocation6 [shape = 's32[1]{0}', space=sflag, size = 0x4, scoped, tag = 'scoped memory for tpu_custom_call.1']
    #allocation7 [shape = 'u8[131072]{0}', space=vmem, size = 0x20000, scoped, tag = 'input window, operand 4, single buffered']
    #allocation8 [shape = 'u8[262144]{0}', space=vmem, size = 0x40000, scoped, tag = 'output window, operand 0, single buffered']
    #allocation9 [shape = 'u8[131072]{0}', space=vmem, size = 0x20000, scoped, tag = 'output window, operand 1, single buffered']
    #allocation10 [shape = 's32[1]{0}', space=sflag, size = 0x4, scoped, tag = 'scoped memory for tpu_custom_call.1']
    %13 = vsyncpa [#allocation3], 0
    %14 = vsyncpa [#allocation6], 0
    %15 = vsyncpa [#allocation4], 0
    %16 = vsyncpa [#allocation10], 0
    // Predicated region
    $region2: #{tpu_custom_call.1} parent=1 // pred_check
      _
    $region3: #{tpu_custom_call.1} parent=1 // pred_check_branch
      %18 = sbr.rel (0) target = $region5
    $region4: #{tpu_custom_call.1} parent=1 // pred_region
      %s20 = ssub.s32 12288, 12288
      %21 = vsyncadd [#allocation3], %s20
      %s22 = sshll.u32 [#allocation2], 4
      %s23 = int_to_ptr.vmem [resolvable:$true] %s22
      %28 = dma.hbm_to_vmem [thread:$0]  %s0, 12288, %s23, [#allocation3], 384, 384, 24
    $region5: #{tpu_custom_call.1} parent=1 // pred_fallthru
      _
    // Predicated region
    $region6: #{tpu_custom_call.1} parent=1 // pred_check
      _
    $region7: #{tpu_custom_call.1} parent=1 // pred_check_branch
      %30 = sbr.rel (0) target = $region9
    $region8: #{tpu_custom_call.1} parent=1 // pred_region
      %s32 = ssub.s32 4096, 4096
      %33 = vsyncadd [#allocation6], %s32
      %s34 = sshll.u32 [#allocation5], 4
      %s35 = int_to_ptr.vmem [resolvable:$true] %s34
      %40 = dma.hbm_to_vmem [thread:$0]  %s1, 4096, %s35, [#allocation6], 128, 128, 8
    $region9: #{tpu_custom_call.1} parent=1 // pred_fallthru
      _
    // Predicated region
    $region10: #{tpu_custom_call.1} parent=1 // pred_check
      _
    $region11: #{tpu_custom_call.1} parent=1 // pred_check_branch
      %42 = sbr.rel (0) target = $region13
    $region12: #{tpu_custom_call.1} parent=1 // pred_region
      _
    $region13: #{tpu_custom_call.1} parent=1 // pred_fallthru
      _
    // Predicated region
    $region14: #{tpu_custom_call.1} parent=1 // pred_check
      _
    $region15: #{tpu_custom_call.1} parent=1 // pred_check_branch
      %44 = sbr.rel (0) target = $region17
    $region16: #{tpu_custom_call.1} parent=1 // pred_region
      _
    $region17: #{tpu_custom_call.1} parent=1 // pred_fallthru
      _
    // Predicated region
    $region18: #{tpu_custom_call.1} parent=1 // pred_check
      _
    $region19: #{tpu_custom_call.1} parent=1 // pred_check_branch
      %46 = sbr.rel (0) target = $region21
    $region20: #{tpu_custom_call.1} parent=1 // pred_region
      %s48 = ssub.s32 4096, 4096
      %49 = vsyncadd [#allocation6], %s48
      %s50 = sshll.u32 [#allocation7], 4
      %s51 = int_to_ptr.vmem [resolvable:$true] %s50
      %56 = dma.hbm_to_vmem [thread:$0]  %s4, 4096, %s51, [#allocation6], 256, 256, 16
    $region21: #{tpu_custom_call.1} parent=1 // pred_fallthru
      _
    // Predicated region
    $region22: #{tpu_custom_call.1} parent=1 // pred_check
      _
    $region23: #{tpu_custom_call.1} parent=1 // pred_check_branch
      %58 = sbr.rel (0) target = $region25
    $region24: #{tpu_custom_call.1} parent=1 // pred_region
      _
    $region25: #{tpu_custom_call.1} parent=1 // pred_fallthru
      _
    // Predicated region
    $region26: #{tpu_custom_call.1} parent=1 // pred_check
      _
    $region27: #{tpu_custom_call.1} parent=1 // pred_check_branch
      %60 = sbr.rel (0) target = $region29
    $region28: #{tpu_custom_call.1} parent=1 // pred_region
      %61 = dma.done [#allocation3], 12288
    $region29: #{tpu_custom_call.1} parent=1 // pred_fallthru
      _
    // Predicated region
    $region30: #{tpu_custom_call.1} parent=1 // pred_check
      _
    $region31: #{tpu_custom_call.1} parent=1 // pred_check_branch
      %63 = sbr.rel (0) target = $region33
    $region32: #{tpu_custom_call.1} parent=1 // pred_region
      %64 = dma.done [#allocation6], 4096
    $region33: #{tpu_custom_call.1} parent=1 // pred_fallthru
      _
    // Predicated region
    $region34: #{tpu_custom_call.1} parent=1 // pred_check
      _
    $region35: #{tpu_custom_call.1} parent=1 // pred_check_branch
      %66 = sbr.rel (0) target = $region37
    $region36: #{tpu_custom_call.1} parent=1 // pred_region
      %67 = dma.done [#allocation6], 4096
    $region37: #{tpu_custom_call.1} parent=1 // pred_fallthru
      _
    %v68 = vld [vmem:[#allocation2] sm:$0xff]
    %v69 = vld [vmem:[#allocation2 + $0x8] sm:$0xff]
    %v70 = vld [vmem:[#allocation2 + $0x18] sm:$0xff]
    %v71 = vld [vmem:[#allocation2 + $0x20] sm:$0xff]
    %v72 = vld [vmem:[#allocation2 + $0x30] sm:$0xff]
    %v73 = vld [vmem:[#allocation2 + $0x38] sm:$0xff]
    %v74 = vld [vmem:[#allocation2 + $0x48] sm:$0xff]
    %v75 = vld [vmem:[#allocation2 + $0x50] sm:$0xff]
    %v76 = vld [vmem:[#allocation2 + $0x60] sm:$0xff]
    %v77 = vld [vmem:[#allocation2 + $0x68] sm:$0xff]
    %v78 = vld [vmem:[#allocation2 + $0x78] sm:$0xff]
    %v79 = vld [vmem:[#allocation2 + $0x80] sm:$0xff]
    %v80 = vld [vmem:[#allocation2 + $0x90] sm:$0xff]
    %v81 = vld [vmem:[#allocation2 + $0x98] sm:$0xff]
    %v82 = vld [vmem:[#allocation2 + $0xa8] sm:$0xff]
    %v83 = vld [vmem:[#allocation2 + $0xb0] sm:$0xff]
    %v84 = vld [vmem:[#allocation2 + $0xc0] sm:$0xff]
    %v85 = vld [vmem:[#allocation2 + $0xc8] sm:$0xff]
    %v86 = vld [vmem:[#allocation2 + $0xd8] sm:$0xff]
    %v87 = vld [vmem:[#allocation2 + $0xe0] sm:$0xff]
    %v88 = vld [vmem:[#allocation2 + $0xf0] sm:$0xff]
    %v89 = vld [vmem:[#allocation2 + $0xf8] sm:$0xff]
    %v90 = vld [vmem:[#allocation2 + $0x108] sm:$0xff]
    %v91 = vld [vmem:[#allocation2 + $0x110] sm:$0xff]
    %v92 = vld [vmem:[#allocation2 + $0x120] sm:$0xff]
    %v93 = vld [vmem:[#allocation2 + $0x128] sm:$0xff]
    %v94 = vld [vmem:[#allocation2 + $0x138] sm:$0xff]
    %v95 = vld [vmem:[#allocation2 + $0x140] sm:$0xff]
    %v96 = vld [vmem:[#allocation2 + $0x150] sm:$0xff]
    %v97 = vld [vmem:[#allocation2 + $0x158] sm:$0xff]
    %v98 = vld [vmem:[#allocation2 + $0x168] sm:$0xff]
    %v99 = vld [vmem:[#allocation2 + $0x170] sm:$0xff]
    %v100 = vld [vmem:[#allocation2 + $0x180] sm:$0xff]
    %v101 = vld [vmem:[#allocation2 + $0x188] sm:$0xff]
    %v102 = vld [vmem:[#allocation2 + $0x198] sm:$0xff]
    %v103 = vld [vmem:[#allocation2 + $0x1a0] sm:$0xff]
    %v104 = vld [vmem:[#allocation2 + $0x1b0] sm:$0xff]
    %v105 = vld [vmem:[#allocation2 + $0x1b8] sm:$0xff]
    %v106 = vld [vmem:[#allocation2 + $0x1c8] sm:$0xff]
    %v107 = vld [vmem:[#allocation2 + $0x1d0] sm:$0xff]
    %v108 = vld [vmem:[#allocation2 + $0x1e0] sm:$0xff]
    %v109 = vld [vmem:[#allocation2 + $0x1e8] sm:$0xff]
    %v110 = vld [vmem:[#allocation2 + $0x1f8] sm:$0xff]
    %v111 = vld [vmem:[#allocation2 + $0x200] sm:$0xff]
    %v112 = vld [vmem:[#allocation2 + $0x210] sm:$0xff]
    %v113 = vld [vmem:[#allocation2 + $0x218] sm:$0xff]
    %v114 = vld [vmem:[#allocation2 + $0x228] sm:$0xff]
    %v115 = vld [vmem:[#allocation2 + $0x230] sm:$0xff]
    %v116 = vld [vmem:[#allocation2 + $0x240] sm:$0xff]
    %v117 = vld [vmem:[#allocation2 + $0x248] sm:$0xff]
    %v118 = vld [vmem:[#allocation2 + $0x258] sm:$0xff]
    %v119 = vld [vmem:[#allocation2 + $0x260] sm:$0xff]
    %v120 = vld [vmem:[#allocation2 + $0x270] sm:$0xff]
    %v121 = vld [vmem:[#allocation2 + $0x278] sm:$0xff]
    %v122 = vld [vmem:[#allocation2 + $0x288] sm:$0xff]
    %v123 = vld [vmem:[#allocation2 + $0x290] sm:$0xff]
    %v124 = vld [vmem:[#allocation2 + $0x2a0] sm:$0xff]
    %v125 = vld [vmem:[#allocation2 + $0x2a8] sm:$0xff]
    %v126 = vld [vmem:[#allocation2 + $0x2b8] sm:$0xff]
    %v127 = vld [vmem:[#allocation2 + $0x2c0] sm:$0xff]
    %v128 = vld [vmem:[#allocation2 + $0x2d0] sm:$0xff]
    %v129 = vld [vmem:[#allocation2 + $0x2d8] sm:$0xff]
    %v130 = vld [vmem:[#allocation2 + $0x2e8] sm:$0xff]
    %v131 = vld [vmem:[#allocation2 + $0x2f0] sm:$0xff]
    %v132 = vld [vmem:[#allocation2 + $0x10] sm:$0xff]
    %v133 = vld [vmem:[#allocation2 + $0x28] sm:$0xff]
    %v134 = vld [vmem:[#allocation2 + $0x40] sm:$0xff]
    %v135 = vld [vmem:[#allocation2 + $0x58] sm:$0xff]
    %v136 = vld [vmem:[#allocation2 + $0x70] sm:$0xff]
    %v137 = vld [vmem:[#allocation2 + $0x88] sm:$0xff]
    %v138 = vld [vmem:[#allocation2 + $0xa0] sm:$0xff]
    %v139 = vld [vmem:[#allocation2 + $0xb8] sm:$0xff]
    %v140 = vld [vmem:[#allocation2 + $0xd0] sm:$0xff]
    %v141 = vld [vmem:[#allocation2 + $0xe8] sm:$0xff]
    %v142 = vld [vmem:[#allocation2 + $0x100] sm:$0xff]
    %v143 = vld [vmem:[#allocation2 + $0x118] sm:$0xff]
    %v144 = vld [vmem:[#allocation2 + $0x130] sm:$0xff]
    %v145 = vld [vmem:[#allocation2 + $0x148] sm:$0xff]
    %v146 = vld [vmem:[#allocation2 + $0x160] sm:$0xff]
    %v147 = vld [vmem:[#allocation2 + $0x178] sm:$0xff]
    %v148 = vld [vmem:[#allocation2 + $0x190] sm:$0xff]
    %v149 = vld [vmem:[#allocation2 + $0x1a8] sm:$0xff]
    %v150 = vld [vmem:[#allocation2 + $0x1c0] sm:$0xff]
    %v151 = vld [vmem:[#allocation2 + $0x1d8] sm:$0xff]
    %v152 = vld [vmem:[#allocation2 + $0x1f0] sm:$0xff]
    %v153 = vld [vmem:[#allocation2 + $0x208] sm:$0xff]
    %v154 = vld [vmem:[#allocation2 + $0x220] sm:$0xff]
    %v155 = vld [vmem:[#allocation2 + $0x238] sm:$0xff]
    %v156 = vld [vmem:[#allocation2 + $0x250] sm:$0xff]
    %v157 = vld [vmem:[#allocation2 + $0x268] sm:$0xff]
    %v158 = vld [vmem:[#allocation2 + $0x280] sm:$0xff]
    %v159 = vld [vmem:[#allocation2 + $0x298] sm:$0xff]
    %v160 = vld [vmem:[#allocation2 + $0x2b0] sm:$0xff]
    %v161 = vld [vmem:[#allocation2 + $0x2c8] sm:$0xff]
    %v162 = vld [vmem:[#allocation2 + $0x2e0] sm:$0xff]
    %v163 = vld [vmem:[#allocation2 + $0x2f8] sm:$0xff]
    %v164 = vld [vmem:[%s5] sm:$0x1]
    %v165 = vld [vmem:[%s5 + $0x1] sm:$0x1]
    %v166 = vld [vmem:[%s5 + $0x2] sm:$0x1]
    %s167 = scalar_lea.vmem %s5, 3
    %v168 = vld [vmem:[%s167] ss:$4 sm:$0x3]
    %v169 = vld [vmem:[#allocation5] sm:$0xff]
    %v170 = vld [vmem:[#allocation5 + $0x8] sm:$0xff]
    %v171 = vld [vmem:[#allocation5 + $0x10] sm:$0xff]
    %v172 = vld [vmem:[#allocation5 + $0x18] sm:$0xff]
    %v173 = vld [vmem:[#allocation5 + $0x20] sm:$0xff]
    %v174 = vld [vmem:[#allocation5 + $0x28] sm:$0xff]
    %v175 = vld [vmem:[#allocation5 + $0x30] sm:$0xff]
    %v176 = vld [vmem:[#allocation5 + $0x38] sm:$0xff]
    %v177 = vld [vmem:[#allocation5 + $0x40] sm:$0xff]
    %v178 = vld [vmem:[#allocation5 + $0x48] sm:$0xff]
    %v179 = vld [vmem:[#allocation5 + $0x50] sm:$0xff]
    %v180 = vld [vmem:[#allocation5 + $0x58] sm:$0xff]
    %v181 = vld [vmem:[#allocation5 + $0x60] sm:$0xff]
    %v182 = vld [vmem:[#allocation5 + $0x68] sm:$0xff]
    %v183 = vld [vmem:[#allocation5 + $0x70] sm:$0xff]
    %v184 = vld [vmem:[#allocation5 + $0x78] sm:$0xff]
    %v185 = vld [vmem:[#allocation5 + $0x80] sm:$0xff]
    %v186 = vld [vmem:[#allocation5 + $0x88] sm:$0xff]
    %v187 = vld [vmem:[#allocation5 + $0x90] sm:$0xff]
    %v188 = vld [vmem:[#allocation5 + $0x98] sm:$0xff]
    %v189 = vld [vmem:[#allocation5 + $0xa0] sm:$0xff]
    %v190 = vld [vmem:[#allocation5 + $0xa8] sm:$0xff]
    %v191 = vld [vmem:[#allocation5 + $0xb0] sm:$0xff]
    %v192 = vld [vmem:[#allocation5 + $0xb8] sm:$0xff]
    %v193 = vld [vmem:[#allocation5 + $0xc0] sm:$0xff]
    %v194 = vld [vmem:[#allocation5 + $0xc8] sm:$0xff]
    %v195 = vld [vmem:[#allocation5 + $0xd0] sm:$0xff]
    %v196 = vld [vmem:[#allocation5 + $0xd8] sm:$0xff]
    %v197 = vld [vmem:[#allocation5 + $0xe0] sm:$0xff]
    %v198 = vld [vmem:[#allocation5 + $0xe8] sm:$0xff]
    %v199 = vld [vmem:[#allocation5 + $0xf0] sm:$0xff]
    %v200 = vld [vmem:[#allocation5 + $0xf8] sm:$0xff]
    %v201 = vlaneseq
    %v202 = vshrl.u32 %v201, 7
    %v203 = vsub.s32 0, %v202
    %v204 = vrot.slane %v164, %v203
    %205 = vmatprep.subr.mxu0 0.0
    %206 = vmatpush1.msra.mxu0 %v169
    %207 = vmatprep.subr.mxu0 0.0
    %208 = vmatpush1.msra.mxu0 %v170
    %209 = vmatprep.subr.mxu0 0.0
    %210 = vmatpush1.msra.mxu0 %v171
    %211 = vmatprep.subr.mxu0 0.0
    %212 = vmatpush1.msra.mxu0 %v172
    %213 = vmatprep.subr.mxu0 0.0
    %214 = vmatpush1.msra.mxu0 %v173
    %215 = vmatprep.subr.mxu0 0.0
    %216 = vmatpush1.msra.mxu0 %v174
    %217 = vmatprep.subr.mxu0 0.0
    %218 = vmatpush1.msra.mxu0 %v175
    %219 = vmatprep.subr.mxu0 0.0
    %220 = vmatpush1.msra.mxu0 %v176
    %221 = vmatprep.subr.mxu0 0.0
    %222 = vmatpush1.msra.mxu0 %v177
    %223 = vmatprep.subr.mxu0 0.0
    %224 = vmatpush1.msra.mxu0 %v178
    %225 = vmatprep.subr.mxu0 0.0
    %226 = vmatpush1.msra.mxu0 %v179
    %227 = vmatprep.subr.mxu0 0.0
    %228 = vmatpush1.msra.mxu0 %v180
    %229 = vmatprep.subr.mxu0 0.0
    %230 = vmatpush1.msra.mxu0 %v181
    %231 = vmatprep.subr.mxu0 0.0
    %232 = vmatpush1.msra.mxu0 %v182
    %233 = vmatprep.subr.mxu0 0.0
    %234 = vmatpush1.msra.mxu0 %v183
    %235 = vmatprep.subr.mxu0 0.0
    %236 = vmatpush1.msra.mxu0 %v184
    %237 = vmatprep.subr.mxu0 0.0
    %238 = vmatpush1.msra.mxu0 %v185
    %239 = vmatprep.subr.mxu0 0.0
    %240 = vmatpush1.msra.mxu0 %v186
    %241 = vmatprep.subr.mxu0 0.0
    %242 = vmatpush1.msra.mxu0 %v187
    %243 = vmatprep.subr.mxu0 0.0
    %244 = vmatpush1.msra.mxu0 %v188
    %245 = vmatprep.subr.mxu0 0.0
    %246 = vmatpush1.msra.mxu0 %v189
    %247 = vmatprep.subr.mxu0 0.0
    %248 = vmatpush1.msra.mxu0 %v190
    %249 = vmatprep.subr.mxu0 0.0
    %250 = vmatpush1.msra.mxu0 %v191
    %251 = vmatprep.subr.mxu0 0.0
    %252 = vmatpush1.msra.mxu0 %v192
    %253 = vmatprep.subr.mxu0 0.0
    %254 = vmatpush1.msra.mxu0 %v193
    %255 = vmatprep.subr.mxu0 0.0
    %256 = vmatpush1.msra.mxu0 %v194
    %257 = vmatprep.subr.mxu0 0.0
    %258 = vmatpush1.msra.mxu0 %v195
    %259 = vmatprep.subr.mxu0 0.0
    %260 = vmatpush1.msra.mxu0 %v196
    %261 = vmatprep.subr.mxu0 0.0
    %262 = vmatpush1.msra.mxu0 %v197
    %263 = vmatprep.subr.mxu0 0.0
    %264 = vmatpush1.msra.mxu0 %v198
    %265 = vmatprep.subr.mxu0 0.0
    %266 = vmatpush1.msra.mxu0 %v199
    %267 = vmatprep.subr.mxu0 0.0
    %268 = vmatpush1.msra.mxu0 %v200
    %269 = vmatprep.mubr.f32.mxu0 %v69
    %270 = vmatmul.mubr.f32.gmra.mrb[0].mxu0 %v68
    %v271 = vpop.f32.mrb[0].mxu0
    %v272 = vadd.f32 %v204, %v271
    %v273 = vpop.f32.mrb[0].mxu0
    %274 = vmatprep.mubr.f32.mxu0 %v71
    %275 = vmatmul.mubr.f32.gmra.mrb[0].mxu0 %v70
    %v276 = vpop.f32.mrb[0].mxu0
    %v277 = vadd.f32 %v204, %v276
    %v278 = vpop.f32.mrb[0].mxu0
    %279 = vmatprep.mubr.f32.mxu0 %v73
    %280 = vmatmul.mubr.f32.gmra.mrb[0].mxu0 %v72
    %v281 = vpop.f32.mrb[0].mxu0
    %v282 = vadd.f32 %v204, %v281
    %v283 = vpop.f32.mrb[0].mxu0
    %284 = vmatprep.mubr.f32.mxu0 %v75
    %285 = vmatmul.mubr.f32.gmra.mrb[0].mxu0 %v74
    %v286 = vpop.f32.mrb[0].mxu0
    %v287 = vadd.f32 %v204, %v286
    %v288 = vpop.f32.mrb[0].mxu0
    %289 = vmatprep.mubr.f32.mxu0 %v77
    %290 = vmatmul.mubr.f32.gmra.mrb[0].mxu0 %v76
    %v291 = vpop.f32.mrb[0].mxu0
    %v292 = vadd.f32 %v204, %v291
    %v293 = vpop.f32.mrb[0].mxu0
    %294 = vmatprep.mubr.f32.mxu0 %v79
    %295 = vmatmul.mubr.f32.gmra.mrb[0].mxu0 %v78
    %v296 = vpop.f32.mrb[0].mxu0
    %v297 = vadd.f32 %v204, %v296
    %v298 = vpop.f32.mrb[0].mxu0
    %299 = vmatprep.mubr.f32.mxu0 %v81
    %300 = vmatmul.mubr.f32.gmra.mrb[0].mxu0 %v80
    %v301 = vpop.f32.mrb[0].mxu0
    %v302 = vadd.f32 %v204, %v301
    %v303 = vpop.f32.mrb[0].mxu0
    %304 = vmatprep.mubr.f32.mxu0 %v83
    %305 = vmatmul.mubr.f32.gmra.mrb[0].mxu0 %v82
    %v306 = vpop.f32.mrb[0].mxu0
    %v307 = vadd.f32 %v204, %v306
    %v308 = vpop.f32.mrb[0].mxu0
    %309 = vmatprep.mubr.f32.mxu0 %v85
    %310 = vmatmul.mubr.f32.gmra.mrb[0].mxu0 %v84
    %v311 = vpop.f32.mrb[0].mxu0
    %v312 = vadd.f32 %v204, %v311
    %v313 = vpop.f32.mrb[0].mxu0
    %314 = vmatprep.mubr.f32.mxu0 %v87
    %315 = vmatmul.mubr.f32.gmra.mrb[0].mxu0 %v86
    %v316 = vpop.f32.mrb[0].mxu0
    %v317 = vadd.f32 %v204, %v316
    %v318 = vpop.f32.mrb[0].mxu0
    %319 = vmatprep.mubr.f32.mxu0 %v89
    %320 = vmatmul.mubr.f32.gmra.mrb[0].mxu0 %v88
    %v321 = vpop.f32.mrb[0].mxu0
    %v322 = vadd.f32 %v204, %v321
    %v323 = vpop.f32.mrb[0].mxu0
    %324 = vmatprep.mubr.f32.mxu0 %v91
    %325 = vmatmul.mubr.f32.gmra.mrb[0].mxu0 %v90
    %v326 = vpop.f32.mrb[0].mxu0
    %v327 = vadd.f32 %v204, %v326
    %v328 = vpop.f32.mrb[0].mxu0
    %329 = vmatprep.mubr.f32.mxu0 %v93
    %330 = vmatmul.mubr.f32.gmra.mrb[0].mxu0 %v92
    %v331 = vpop.f32.mrb[0].mxu0
    %v332 = vadd.f32 %v204, %v331
    %v333 = vpop.f32.mrb[0].mxu0
    %334 = vmatprep.mubr.f32.mxu0 %v95
    %335 = vmatmul.mubr.f32.gmra.mrb[0].mxu0 %v94
    %v336 = vpop.f32.mrb[0].mxu0
    %v337 = vadd.f32 %v204, %v336
    %v338 = vpop.f32.mrb[0].mxu0
    %339 = vmatprep.mubr.f32.mxu0 %v97
    %340 = vmatmul.mubr.f32.gmra.mrb[0].mxu0 %v96
    %v341 = vpop.f32.mrb[0].mxu0
    %v342 = vadd.f32 %v204, %v341
    %v343 = vpop.f32.mrb[0].mxu0
    %344 = vmatprep.mubr.f32.mxu0 %v99
    %345 = vmatmul.mubr.f32.gmra.mrb[0].mxu0 %v98
    %v346 = vpop.f32.mrb[0].mxu0
    %v347 = vadd.f32 %v204, %v346
    %v348 = vpop.f32.mrb[0].mxu0
    %349 = vmatprep.mubr.f32.mxu0 %v101
    %350 = vmatmul.mubr.f32.gmra.mrb[0].mxu0 %v100
    %v351 = vpop.f32.mrb[0].mxu0
    %v352 = vadd.f32 %v204, %v351
    %v353 = vpop.f32.mrb[0].mxu0
    %354 = vmatprep.mubr.f32.mxu0 %v103
    %355 = vmatmul.mubr.f32.gmra.mrb[0].mxu0 %v102
    %v356 = vpop.f32.mrb[0].mxu0
    %v357 = vadd.f32 %v204, %v356
    %v358 = vpop.f32.mrb[0].mxu0
    %359 = vmatprep.mubr.f32.mxu0 %v105
    %360 = vmatmul.mubr.f32.gmra.mrb[0].mxu0 %v104
    %v361 = vpop.f32.mrb[0].mxu0
    %v362 = vadd.f32 %v204, %v361
    %v363 = vpop.f32.mrb[0].mxu0
    %364 = vmatprep.mubr.f32.mxu0 %v107
    %365 = vmatmul.mubr.f32.gmra.mrb[0].mxu0 %v106
    %v366 = vpop.f32.mrb[0].mxu0
    %v367 = vadd.f32 %v204, %v366
    %v368 = vpop.f32.mrb[0].mxu0
    %369 = vmatprep.mubr.f32.mxu0 %v109
    %370 = vmatmul.mubr.f32.gmra.mrb[0].mxu0 %v108
    %v371 = vpop.f32.mrb[0].mxu0
    %v372 = vadd.f32 %v204, %v371
    %v373 = vpop.f32.mrb[0].mxu0
    %374 = vmatprep.mubr.f32.mxu0 %v111
    %375 = vmatmul.mubr.f32.gmra.mrb[0].mxu0 %v110
    %v376 = vpop.f32.mrb[0].mxu0
    %v377 = vadd.f32 %v204, %v376
    %v378 = vpop.f32.mrb[0].mxu0
    %379 = vmatprep.mubr.f32.mxu0 %v113
    %380 = vmatmul.mubr.f32.gmra.mrb[0].mxu0 %v112
    %v381 = vpop.f32.mrb[0].mxu0
    %v382 = vadd.f32 %v204, %v381
    %v383 = vpop.f32.mrb[0].mxu0
    %384 = vmatprep.mubr.f32.mxu0 %v115
    %385 = vmatmul.mubr.f32.gmra.mrb[0].mxu0 %v114
    %v386 = vpop.f32.mrb[0].mxu0
    %v387 = vadd.f32 %v204, %v386
    %v388 = vpop.f32.mrb[0].mxu0
    %389 = vmatprep.mubr.f32.mxu0 %v117
    %390 = vmatmul.mubr.f32.gmra.mrb[0].mxu0 %v116
    %v391 = vpop.f32.mrb[0].mxu0
    %v392 = vadd.f32 %v204, %v391
    %v393 = vpop.f32.mrb[0].mxu0
    %394 = vmatprep.mubr.f32.mxu0 %v119
    %395 = vmatmul.mubr.f32.gmra.mrb[0].mxu0 %v118
    %v396 = vpop.f32.mrb[0].mxu0
    %v397 = vadd.f32 %v204, %v396
    %v398 = vpop.f32.mrb[0].mxu0
    %399 = vmatprep.mubr.f32.mxu0 %v121
    %400 = vmatmul.mubr.f32.gmra.mrb[0].mxu0 %v120
    %v401 = vpop.f32.mrb[0].mxu0
    %v402 = vadd.f32 %v204, %v401
    %v403 = vpop.f32.mrb[0].mxu0
    %404 = vmatprep.mubr.f32.mxu0 %v123
    %405 = vmatmul.mubr.f32.gmra.mrb[0].mxu0 %v122
    %v406 = vpop.f32.mrb[0].mxu0
    %v407 = vadd.f32 %v204, %v406
    %v408 = vpop.f32.mrb[0].mxu0
    %409 = vmatprep.mubr.f32.mxu0 %v125
    %410 = vmatmul.mubr.f32.gmra.mrb[0].mxu0 %v124
    %v411 = vpop.f32.mrb[0].mxu0
    %v412 = vadd.f32 %v204, %v411
    %v413 = vpop.f32.mrb[0].mxu0
    %414 = vmatprep.mubr.f32.mxu0 %v127
    %415 = vmatmul.mubr.f32.gmra.mrb[0].mxu0 %v126
    %v416 = vpop.f32.mrb[0].mxu0
    %v417 = vadd.f32 %v204, %v416
    %v418 = vpop.f32.mrb[0].mxu0
    %419 = vmatprep.mubr.f32.mxu0 %v129
    %420 = vmatmul.mubr.f32.gmra.mrb[0].mxu0 %v128
    %v421 = vpop.f32.mrb[0].mxu0
    %v422 = vadd.f32 %v204, %v421
    %v423 = vpop.f32.mrb[0].mxu0
    %424 = vmatprep.mubr.f32.mxu0 %v131
    %425 = vmatmul.mubr.f32.gmra.mrb[0].mxu0 %v130
    %v426 = vpop.f32.mrb[0].mxu0
    %v427 = vadd.f32 %v204, %v426
    %v428 = vpop.f32.mrb[0].mxu0
    %429 = vdwg.mxu0
    %v430 = vmax.f32 %v272, 0.0
    %v431 = vmax.f32 %v277, 0.0
    %v432 = vmax.f32 %v282, 0.0
    %v433 = vmax.f32 %v287, 0.0
    %v434 = vmax.f32 %v292, 0.0
    %v435 = vmax.f32 %v297, 0.0
    %v436 = vmax.f32 %v302, 0.0
    %v437 = vmax.f32 %v307, 0.0
    %v438 = vmax.f32 %v312, 0.0
    %v439 = vmax.f32 %v317, 0.0
    %v440 = vmax.f32 %v322, 0.0
    %v441 = vmax.f32 %v327, 0.0
    %v442 = vmax.f32 %v332, 0.0
    %v443 = vmax.f32 %v337, 0.0
    %v444 = vmax.f32 %v342, 0.0
    %v445 = vmax.f32 %v347, 0.0
    %v446 = vmax.f32 %v352, 0.0
    %v447 = vmax.f32 %v357, 0.0
    %v448 = vmax.f32 %v362, 0.0
    %v449 = vmax.f32 %v367, 0.0
    %v450 = vmax.f32 %v372, 0.0
    %v451 = vmax.f32 %v377, 0.0
    %v452 = vmax.f32 %v382, 0.0
    %v453 = vmax.f32 %v387, 0.0
    %v454 = vmax.f32 %v392, 0.0
    %v455 = vmax.f32 %v397, 0.0
    %v456 = vmax.f32 %v402, 0.0
    %v457 = vmax.f32 %v407, 0.0
    %v458 = vmax.f32 %v412, 0.0
    %v459 = vmax.f32 %v417, 0.0
    %v460 = vmax.f32 %v422, 0.0
    %v461 = vmax.f32 %v427, 0.0
    %v462 = vld [vmem:[%s2] sm:$0xff]
    %v463 = vld [vmem:[%s2 + $0x8] sm:$0xff]
    %v464 = vld [vmem:[%s2 + $0x10] sm:$0xff]
    %v465 = vld [vmem:[%s2 + $0x18] sm:$0xff]
    %v466 = vld [vmem:[%s2 + $0x20] sm:$0xff]
    %v467 = vld [vmem:[%s2 + $0x28] sm:$0xff]
    %v468 = vld [vmem:[%s2 + $0x30] sm:$0xff]
    %v469 = vld [vmem:[%s2 + $0x38] sm:$0xff]
    %v470 = vld [vmem:[%s2 + $0x40] sm:$0xff]
    %v471 = vld [vmem:[%s2 + $0x48] sm:$0xff]
    %v472 = vld [vmem:[%s2 + $0x50] sm:$0xff]
    %v473 = vld [vmem:[%s2 + $0x58] sm:$0xff]
    %v474 = vld [vmem:[%s2 + $0x60] sm:$0xff]
    %v475 = vld [vmem:[%s2 + $0x68] sm:$0xff]
    %v476 = vld [vmem:[%s2 + $0x70] sm:$0xff]
    %v477 = vld [vmem:[%s2 + $0x78] sm:$0xff]
    %v478 = vlaneseq
    %v479 = vshrl.u32 %v478, 7
    %v480 = vsub.s32 0, %v479
    %v481 = vrot.slane %v165, %v480
    %482 = vmatprep.subr.mxu0 0.0
    %483 = vmatpush1.msra.mxu0 %v462
    %484 = vmatprep.subr.mxu0 0.0
    %485 = vmatpush1.msra.mxu0 %v463
    %486 = vmatprep.subr.mxu0 0.0
    %487 = vmatpush1.msra.mxu0 %v464
    %488 = vmatprep.subr.mxu0 0.0
    %489 = vmatpush1.msra.mxu0 %v465
    %490 = vmatprep.subr.mxu0 0.0
    %491 = vmatpush1.msra.mxu0 %v466
    %492 = vmatprep.subr.mxu0 0.0
    %493 = vmatpush1.msra.mxu0 %v467
    %494 = vmatprep.subr.mxu0 0.0
    %495 = vmatpush1.msra.mxu0 %v468
    %496 = vmatprep.subr.mxu0 0.0
    %497 = vmatpush1.msra.mxu0 %v469
    %498 = vmatprep.subr.mxu0 0.0
    %499 = vmatpush1.msra.mxu0 %v470
    %500 = vmatprep.subr.mxu0 0.0
    %501 = vmatpush1.msra.mxu0 %v471
    %502 = vmatprep.subr.mxu0 0.0
    %503 = vmatpush1.msra.mxu0 %v472
    %504 = vmatprep.subr.mxu0 0.0
    %505 = vmatpush1.msra.mxu0 %v473
    %506 = vmatprep.subr.mxu0 0.0
    %507 = vmatpush1.msra.mxu0 %v474
    %508 = vmatprep.subr.mxu0 0.0
    %509 = vmatpush1.msra.mxu0 %v475
    %510 = vmatprep.subr.mxu0 0.0
    %511 = vmatpush1.msra.mxu0 %v476
    %512 = vmatprep.subr.mxu0 0.0
    %513 = vmatpush1.msra.mxu0 %v477
    %514 = vmatprep.subr.mxu0 0.0
    %515 = vmatpush1.msra.mxu0 0.0
    %516 = vmatprep.subr.mxu0 0.0
    %517 = vmatpush1.msra.mxu0 0.0
    %518 = vmatprep.subr.mxu0 0.0
    %519 = vmatpush1.msra.mxu0 0.0
    %520 = vmatprep.subr.mxu0 0.0
    %521 = vmatpush1.msra.mxu0 0.0
    %522 = vmatprep.subr.mxu0 0.0
    %523 = vmatpush1.msra.mxu0 0.0
    %524 = vmatprep.subr.mxu0 0.0
    %525 = vmatpush1.msra.mxu0 0.0
    %526 = vmatprep.subr.mxu0 0.0
    %527 = vmatpush1.msra.mxu0 0.0
    %528 = vmatprep.subr.mxu0 0.0
    %529 = vmatpush1.msra.mxu0 0.0
    %530 = vmatprep.subr.mxu0 0.0
    %531 = vmatpush1.msra.mxu0 0.0
    %532 = vmatprep.subr.mxu0 0.0
    %533 = vmatpush1.msra.mxu0 0.0
    %534 = vmatprep.subr.mxu0 0.0
    %535 = vmatpush1.msra.mxu0 0.0
    %536 = vmatprep.subr.mxu0 0.0
    %537 = vmatpush1.msra.mxu0 0.0
    %538 = vmatprep.subr.mxu0 0.0
    %539 = vmatpush1.msra.mxu0 0.0
    %540 = vmatprep.subr.mxu0 0.0
    %541 = vmatpush1.msra.mxu0 0.0
    %542 = vmatprep.subr.mxu0 0.0
    %543 = vmatpush1.msra.mxu0 0.0
    %544 = vmatprep.subr.mxu0 0.0
    %545 = vmatpush1.msra.mxu0 0.0
    %546 = vmatprep.mubr.f32.mxu0 0.0
    %547 = vmatmul.mubr.f32.gmra.mrb[0].mxu0 %v430
    %v548 = vpop.f32.mrb[0].mxu0
    %v549 = vadd.f32 %v481, %v548
    %v550 = vpop.f32.mrb[0].mxu0
    %551 = vmatprep.mubr.f32.mxu0 0.0
    %552 = vmatmul.mubr.f32.gmra.mrb[0].mxu0 %v431
    %v553 = vpop.f32.mrb[0].mxu0
    %v554 = vadd.f32 %v481, %v553
    %v555 = vpop.f32.mrb[0].mxu0
    %556 = vmatprep.mubr.f32.mxu0 0.0
    %557 = vmatmul.mubr.f32.gmra.mrb[0].mxu0 %v432
    %v558 = vpop.f32.mrb[0].mxu0
    %v559 = vadd.f32 %v481, %v558
    %v560 = vpop.f32.mrb[0].mxu0
    %561 = vmatprep.mubr.f32.mxu0 0.0
    %562 = vmatmul.mubr.f32.gmra.mrb[0].mxu0 %v433
    %v563 = vpop.f32.mrb[0].mxu0
    %v564 = vadd.f32 %v481, %v563
    %v565 = vpop.f32.mrb[0].mxu0
    %566 = vmatprep.mubr.f32.mxu0 0.0
    %567 = vmatmul.mubr.f32.gmra.mrb[0].mxu0 %v434
    %v568 = vpop.f32.mrb[0].mxu0
    %v569 = vadd.f32 %v481, %v568
    %v570 = vpop.f32.mrb[0].mxu0
    %571 = vmatprep.mubr.f32.mxu0 0.0
    %572 = vmatmul.mubr.f32.gmra.mrb[0].mxu0 %v435
    %v573 = vpop.f32.mrb[0].mxu0
    %v574 = vadd.f32 %v481, %v573
    %v575 = vpop.f32.mrb[0].mxu0
    %576 = vmatprep.mubr.f32.mxu0 0.0
    %577 = vmatmul.mubr.f32.gmra.mrb[0].mxu0 %v436
    %v578 = vpop.f32.mrb[0].mxu0
    %v579 = vadd.f32 %v481, %v578
    %v580 = vpop.f32.mrb[0].mxu0
    %581 = vmatprep.mubr.f32.mxu0 0.0
    %582 = vmatmul.mubr.f32.gmra.mrb[0].mxu0 %v437
    %v583 = vpop.f32.mrb[0].mxu0
    %v584 = vadd.f32 %v481, %v583
    %v585 = vpop.f32.mrb[0].mxu0
    %586 = vmatprep.mubr.f32.mxu0 0.0
    %587 = vmatmul.mubr.f32.gmra.mrb[0].mxu0 %v438
    %v588 = vpop.f32.mrb[0].mxu0
    %v589 = vadd.f32 %v481, %v588
    %v590 = vpop.f32.mrb[0].mxu0
    %591 = vmatprep.mubr.f32.mxu0 0.0
    %592 = vmatmul.mubr.f32.gmra.mrb[0].mxu0 %v439
    %v593 = vpop.f32.mrb[0].mxu0
    %v594 = vadd.f32 %v481, %v593
    %v595 = vpop.f32.mrb[0].mxu0
    %596 = vmatprep.mubr.f32.mxu0 0.0
    %597 = vmatmul.mubr.f32.gmra.mrb[0].mxu0 %v440
    %v598 = vpop.f32.mrb[0].mxu0
    %v599 = vadd.f32 %v481, %v598
    %v600 = vpop.f32.mrb[0].mxu0
    %601 = vmatprep.mubr.f32.mxu0 0.0
    %602 = vmatmul.mubr.f32.gmra.mrb[0].mxu0 %v441
    %v603 = vpop.f32.mrb[0].mxu0
    %v604 = vadd.f32 %v481, %v603
    %v605 = vpop.f32.mrb[0].mxu0
    %606 = vmatprep.mubr.f32.mxu0 0.0
    %607 = vmatmul.mubr.f32.gmra.mrb[0].mxu0 %v442
    %v608 = vpop.f32.mrb[0].mxu0
    %v609 = vadd.f32 %v481, %v608
    %v610 = vpop.f32.mrb[0].mxu0
    %611 = vmatprep.mubr.f32.mxu0 0.0
    %612 = vmatmul.mubr.f32.gmra.mrb[0].mxu0 %v443
    %v613 = vpop.f32.mrb[0].mxu0
    %v614 = vadd.f32 %v481, %v613
    %v615 = vpop.f32.mrb[0].mxu0
    %616 = vmatprep.mubr.f32.mxu0 0.0
    %617 = vmatmul.mubr.f32.gmra.mrb[0].mxu0 %v444
    %v618 = vpop.f32.mrb[0].mxu0
    %v619 = vadd.f32 %v481, %v618
    %v620 = vpop.f32.mrb[0].mxu0
    %621 = vmatprep.mubr.f32.mxu0 0.0
    %622 = vmatmul.mubr.f32.gmra.mrb[0].mxu0 %v445
    %v623 = vpop.f32.mrb[0].mxu0
    %v624 = vadd.f32 %v481, %v623
    %v625 = vpop.f32.mrb[0].mxu0
    %626 = vmatprep.mubr.f32.mxu0 0.0
    %627 = vmatmul.mubr.f32.gmra.mrb[0].mxu0 %v446
    %v628 = vpop.f32.mrb[0].mxu0
    %v629 = vadd.f32 %v481, %v628
    %v630 = vpop.f32.mrb[0].mxu0
    %631 = vmatprep.mubr.f32.mxu0 0.0
    %632 = vmatmul.mubr.f32.gmra.mrb[0].mxu0 %v447
    %v633 = vpop.f32.mrb[0].mxu0
    %v634 = vadd.f32 %v481, %v633
    %v635 = vpop.f32.mrb[0].mxu0
    %636 = vmatprep.mubr.f32.mxu0 0.0
    %637 = vmatmul.mubr.f32.gmra.mrb[0].mxu0 %v448
    %v638 = vpop.f32.mrb[0].mxu0
    %v639 = vadd.f32 %v481, %v638
    %v640 = vpop.f32.mrb[0].mxu0
    %641 = vmatprep.mubr.f32.mxu0 0.0
    %642 = vmatmul.mubr.f32.gmra.mrb[0].mxu0 %v449
    %v643 = vpop.f32.mrb[0].mxu0
    %v644 = vadd.f32 %v481, %v643
    %v645 = vpop.f32.mrb[0].mxu0
    %646 = vmatprep.mubr.f32.mxu0 0.0
    %647 = vmatmul.mubr.f32.gmra.mrb[0].mxu0 %v450
    %v648 = vpop.f32.mrb[0].mxu0
    %v649 = vadd.f32 %v481, %v648
    %v650 = vpop.f32.mrb[0].mxu0
    %651 = vmatprep.mubr.f32.mxu0 0.0
    %652 = vmatmul.mubr.f32.gmra.mrb[0].mxu0 %v451
    %v653 = vpop.f32.mrb[0].mxu0
    %v654 = vadd.f32 %v481, %v653
    %v655 = vpop.f32.mrb[0].mxu0
    %656 = vmatprep.mubr.f32.mxu0 0.0
    %657 = vmatmul.mubr.f32.gmra.mrb[0].mxu0 %v452
    %v658 = vpop.f32.mrb[0].mxu0
    %v659 = vadd.f32 %v481, %v658
    %v660 = vpop.f32.mrb[0].mxu0
    %661 = vmatprep.mubr.f32.mxu0 0.0
    %662 = vmatmul.mubr.f32.gmra.mrb[0].mxu0 %v453
    %v663 = vpop.f32.mrb[0].mxu0
    %v664 = vadd.f32 %v481, %v663
    %v665 = vpop.f32.mrb[0].mxu0
    %666 = vmatprep.mubr.f32.mxu0 0.0
    %667 = vmatmul.mubr.f32.gmra.mrb[0].mxu0 %v454
    %v668 = vpop.f32.mrb[0].mxu0
    %v669 = vadd.f32 %v481, %v668
    %v670 = vpop.f32.mrb[0].mxu0
    %671 = vmatprep.mubr.f32.mxu0 0.0
    %672 = vmatmul.mubr.f32.gmra.mrb[0].mxu0 %v455
    %v673 = vpop.f32.mrb[0].mxu0
    %v674 = vadd.f32 %v481, %v673
    %v675 = vpop.f32.mrb[0].mxu0
    %676 = vmatprep.mubr.f32.mxu0 0.0
    %677 = vmatmul.mubr.f32.gmra.mrb[0].mxu0 %v456
    %v678 = vpop.f32.mrb[0].mxu0
    %v679 = vadd.f32 %v481, %v678
    %v680 = vpop.f32.mrb[0].mxu0
    %681 = vmatprep.mubr.f32.mxu0 0.0
    %682 = vmatmul.mubr.f32.gmra.mrb[0].mxu0 %v457
    %v683 = vpop.f32.mrb[0].mxu0
    %v684 = vadd.f32 %v481, %v683
    %v685 = vpop.f32.mrb[0].mxu0
    %686 = vmatprep.mubr.f32.mxu0 0.0
    %687 = vmatmul.mubr.f32.gmra.mrb[0].mxu0 %v458
    %v688 = vpop.f32.mrb[0].mxu0
    %v689 = vadd.f32 %v481, %v688
    %v690 = vpop.f32.mrb[0].mxu0
    %691 = vmatprep.mubr.f32.mxu0 0.0
    %692 = vmatmul.mubr.f32.gmra.mrb[0].mxu0 %v459
    %v693 = vpop.f32.mrb[0].mxu0
    %v694 = vadd.f32 %v481, %v693
    %v695 = vpop.f32.mrb[0].mxu0
    %696 = vmatprep.mubr.f32.mxu0 0.0
    %697 = vmatmul.mubr.f32.gmra.mrb[0].mxu0 %v460
    %v698 = vpop.f32.mrb[0].mxu0
    %v699 = vadd.f32 %v481, %v698
    %v700 = vpop.f32.mrb[0].mxu0
    %701 = vmatprep.mubr.f32.mxu0 0.0
    %702 = vmatmul.mubr.f32.gmra.mrb[0].mxu0 %v461
    %v703 = vpop.f32.mrb[0].mxu0
    %v704 = vadd.f32 %v481, %v703
    %v705 = vpop.f32.mrb[0].mxu0
    %706 = vdwg.mxu0
    %v707 = vmul.f32 %v549, 0.5
    %v708 = vmul.f32 %v554, 0.5
    %v709 = vmul.f32 %v559, 0.5
    %v710 = vmul.f32 %v564, 0.5
    %v711 = vmul.f32 %v569, 0.5
    %v712 = vmul.f32 %v574, 0.5
    %v713 = vmul.f32 %v579, 0.5
    %v714 = vmul.f32 %v584, 0.5
    %v715 = vmul.f32 %v589, 0.5
    %v716 = vmul.f32 %v594, 0.5
    %v717 = vmul.f32 %v599, 0.5
    %v718 = vmul.f32 %v604, 0.5
    %v719 = vmul.f32 %v609, 0.5
    %v720 = vmul.f32 %v614, 0.5
    %v721 = vmul.f32 %v619, 0.5
    %v722 = vmul.f32 %v624, 0.5
    %v723 = vmul.f32 %v629, 0.5
    %v724 = vmul.f32 %v634, 0.5
    %v725 = vmul.f32 %v639, 0.5
    %v726 = vmul.f32 %v644, 0.5
    %v727 = vmul.f32 %v649, 0.5
    %v728 = vmul.f32 %v654, 0.5
    %v729 = vmul.f32 %v659, 0.5
    %v730 = vmul.f32 %v664, 0.5
    %v731 = vmul.f32 %v669, 0.5
    %v732 = vmul.f32 %v674, 0.5
    %v733 = vmul.f32 %v679, 0.5
    %v734 = vmul.f32 %v684, 0.5
    %v735 = vmul.f32 %v689, 0.5
    %v736 = vmul.f32 %v694, 0.5
    %v737 = vmul.f32 %v699, 0.5
    %v738 = vmul.f32 %v704, 0.5
    %v739 = vmul.f32 %v707, 1.442695
    %v740 = vpow.pop %v739
    %v741 = vmul.f32 %v708, 1.442695
    %v742 = vpow.pop %v741
    %v743 = vmul.f32 %v709, 1.442695
    %v744 = vpow.pop %v743
    %v745 = vmul.f32 %v710, 1.442695
    %v746 = vpow.pop %v745
    %v747 = vmul.f32 %v711, 1.442695
    %v748 = vpow.pop %v747
    %v749 = vmul.f32 %v712, 1.442695
    %v750 = vpow.pop %v749
    %v751 = vmul.f32 %v713, 1.442695
    %v752 = vpow.pop %v751
    %v753 = vmul.f32 %v714, 1.442695
    %v754 = vpow.pop %v753
    %v755 = vmul.f32 %v715, 1.442695
    %v756 = vpow.pop %v755
    %v757 = vmul.f32 %v716, 1.442695
    %v758 = vpow.pop %v757
    %v759 = vmul.f32 %v717, 1.442695
    %v760 = vpow.pop %v759
    %v761 = vmul.f32 %v718, 1.442695
    %v762 = vpow.pop %v761
    %v763 = vmul.f32 %v719, 1.442695
    %v764 = vpow.pop %v763
    %v765 = vmul.f32 %v720, 1.442695
    %v766 = vpow.pop %v765
    %v767 = vmul.f32 %v721, 1.442695
    %v768 = vpow.pop %v767
    %v769 = vmul.f32 %v722, 1.442695
    %v770 = vpow.pop %v769
    %v771 = vmul.f32 %v723, 1.442695
    %v772 = vpow.pop %v771
    %v773 = vmul.f32 %v724, 1.442695
    %v774 = vpow.pop %v773
    %v775 = vmul.f32 %v725, 1.442695
    %v776 = vpow.pop %v775
    %v777 = vmul.f32 %v726, 1.442695
    %v778 = vpow.pop %v777
    %v779 = vmul.f32 %v727, 1.442695
    %v780 = vpow.pop %v779
    %v781 = vmul.f32 %v728, 1.442695
    %v782 = vpow.pop %v781
    %v783 = vmul.f32 %v729, 1.442695
    %v784 = vpow.pop %v783
    %v785 = vmul.f32 %v730, 1.442695
    %v786 = vpow.pop %v785
    %v787 = vmul.f32 %v731, 1.442695
    %v788 = vpow.pop %v787
    %v789 = vmul.f32 %v732, 1.442695
    %v790 = vpow.pop %v789
    %v791 = vmul.f32 %v733, 1.442695
    %v792 = vpow.pop %v791
    %v793 = vmul.f32 %v734, 1.442695
    %v794 = vpow.pop %v793
    %v795 = vmul.f32 %v735, 1.442695
    %v796 = vpow.pop %v795
    %v797 = vmul.f32 %v736, 1.442695
    %v798 = vpow.pop %v797
    %v799 = vmul.f32 %v737, 1.442695
    %v800 = vpow.pop %v799
    %v801 = vmul.f32 %v738, 1.442695
    %v802 = vpow.pop %v801
    %835 = vrot.lane.b32.xlu0 %v740, 112
    %v836 = vpop.permute.xlu0 %835
    %837 = vrot.lane.b32.xlu0 %v742, 112
    %v838 = vpop.permute.xlu0 %837
    %839 = vrot.lane.b32.xlu0 %v744, 112
    %v840 = vpop.permute.xlu0 %839
    %841 = vrot.lane.b32.xlu0 %v746, 112
    %v842 = vpop.permute.xlu0 %841
    %843 = vrot.lane.b32.xlu0 %v748, 112
    %v844 = vpop.permute.xlu0 %843
    %845 = vrot.lane.b32.xlu0 %v750, 112
    %v846 = vpop.permute.xlu0 %845
    %847 = vrot.lane.b32.xlu0 %v752, 112
    %v848 = vpop.permute.xlu0 %847
    %849 = vrot.lane.b32.xlu0 %v754, 112
    %v850 = vpop.permute.xlu0 %849
    %851 = vrot.lane.b32.xlu0 %v756, 112
    %v852 = vpop.permute.xlu0 %851
    %853 = vrot.lane.b32.xlu0 %v758, 112
    %v854 = vpop.permute.xlu0 %853
    %855 = vrot.lane.b32.xlu0 %v760, 112
    %v856 = vpop.permute.xlu0 %855
    %857 = vrot.lane.b32.xlu0 %v762, 112
    %v858 = vpop.permute.xlu0 %857
    %859 = vrot.lane.b32.xlu0 %v764, 112
    %v860 = vpop.permute.xlu0 %859
    %861 = vrot.lane.b32.xlu0 %v766, 112
    %v862 = vpop.permute.xlu0 %861
    %863 = vrot.lane.b32.xlu0 %v768, 112
    %v864 = vpop.permute.xlu0 %863
    %865 = vrot.lane.b32.xlu0 %v770, 112
    %v866 = vpop.permute.xlu0 %865
    %867 = vrot.lane.b32.xlu0 %v772, 112
    %v868 = vpop.permute.xlu0 %867
    %869 = vrot.lane.b32.xlu0 %v774, 112
    %v870 = vpop.permute.xlu0 %869
    %871 = vrot.lane.b32.xlu0 %v776, 112
    %v872 = vpop.permute.xlu0 %871
    %873 = vrot.lane.b32.xlu0 %v778, 112
    %v874 = vpop.permute.xlu0 %873
    %875 = vrot.lane.b32.xlu0 %v780, 112
    %v876 = vpop.permute.xlu0 %875
    %877 = vrot.lane.b32.xlu0 %v782, 112
    %v878 = vpop.permute.xlu0 %877
    %879 = vrot.lane.b32.xlu0 %v784, 112
    %v880 = vpop.permute.xlu0 %879
    %881 = vrot.lane.b32.xlu0 %v786, 112
    %v882 = vpop.permute.xlu0 %881
    %883 = vrot.lane.b32.xlu0 %v788, 112
    %v884 = vpop.permute.xlu0 %883
    %885 = vrot.lane.b32.xlu0 %v790, 112
    %v886 = vpop.permute.xlu0 %885
    %887 = vrot.lane.b32.xlu0 %v792, 112
    %v888 = vpop.permute.xlu0 %887
    %889 = vrot.lane.b32.xlu0 %v794, 112
    %v890 = vpop.permute.xlu0 %889
    %891 = vrot.lane.b32.xlu0 %v796, 112
    %v892 = vpop.permute.xlu0 %891
    %893 = vrot.lane.b32.xlu0 %v798, 112
    %v894 = vpop.permute.xlu0 %893
    %895 = vrot.lane.b32.xlu0 %v800, 112
    %v896 = vpop.permute.xlu0 %895
    %897 = vrot.lane.b32.xlu0 %v802, 112
    %v898 = vpop.permute.xlu0 %897
    %v931 = vmul.f32 %v132, %v836
    %v932 = vmul.f32 %v133, %v838
    %v933 = vmul.f32 %v134, %v840
    %v934 = vmul.f32 %v135, %v842
    %v935 = vmul.f32 %v136, %v844
    %v936 = vmul.f32 %v137, %v846
    %v937 = vmul.f32 %v138, %v848
    %v938 = vmul.f32 %v139, %v850
    %v939 = vmul.f32 %v140, %v852
    %v940 = vmul.f32 %v141, %v854
    %v941 = vmul.f32 %v142, %v856
    %v942 = vmul.f32 %v143, %v858
    %v943 = vmul.f32 %v144, %v860
    %v944 = vmul.f32 %v145, %v862
    %v945 = vmul.f32 %v146, %v864
    %v946 = vmul.f32 %v147, %v866
    %v947 = vmul.f32 %v148, %v868
    %v948 = vmul.f32 %v149, %v870
    %v949 = vmul.f32 %v150, %v872
    %v950 = vmul.f32 %v151, %v874
    %v951 = vmul.f32 %v152, %v876
    %v952 = vmul.f32 %v153, %v878
    %v953 = vmul.f32 %v154, %v880
    %v954 = vmul.f32 %v155, %v882
    %v955 = vmul.f32 %v156, %v884
    %v956 = vmul.f32 %v157, %v886
    %v957 = vmul.f32 %v158, %v888
    %v958 = vmul.f32 %v159, %v890
    %v959 = vmul.f32 %v160, %v892
    %v960 = vmul.f32 %v161, %v894
    %v961 = vmul.f32 %v162, %v896
    %v962 = vmul.f32 %v163, %v898
    %v963 = vadd.f32 %v549, %v931
    %v964 = vadd.f32 %v554, %v932
    %v965 = vadd.f32 %v559, %v933
    %v966 = vadd.f32 %v564, %v934
    %v967 = vadd.f32 %v569, %v935
    %v968 = vadd.f32 %v574, %v936
    %v969 = vadd.f32 %v579, %v937
    %v970 = vadd.f32 %v584, %v938
    %v971 = vadd.f32 %v589, %v939
    %v972 = vadd.f32 %v594, %v940
    %v973 = vadd.f32 %v599, %v941
    %v974 = vadd.f32 %v604, %v942
    %v975 = vadd.f32 %v609, %v943
    %v976 = vadd.f32 %v614, %v944
    %v977 = vadd.f32 %v619, %v945
    %v978 = vadd.f32 %v624, %v946
    %v979 = vadd.f32 %v629, %v947
    %v980 = vadd.f32 %v634, %v948
    %v981 = vadd.f32 %v639, %v949
    %v982 = vadd.f32 %v644, %v950
    %v983 = vadd.f32 %v649, %v951
    %v984 = vadd.f32 %v654, %v952
    %v985 = vadd.f32 %v659, %v953
    %v986 = vadd.f32 %v664, %v954
    %v987 = vadd.f32 %v669, %v955
    %v988 = vadd.f32 %v674, %v956
    %v989 = vadd.f32 %v679, %v957
    %v990 = vadd.f32 %v684, %v958
    %v991 = vadd.f32 %v689, %v959
    %v992 = vadd.f32 %v694, %v960
    %v993 = vadd.f32 %v699, %v961
    %v994 = vadd.f32 %v704, %v962
    %v995 = vld [vmem:[%s3] sm:$0xff]
    %v996 = vld [vmem:[%s3 + $0x8] sm:$0xff]
    %v997 = vlaneseq
    %v998 = vshrl.u32 %v997, 7
    %v999 = vsub.s32 0, %v998
    %v1000 = vrot.slane %v166, %v999
    %vm1001 = vcmask 130048
    %v1003 = vsel %vm1001, %v963, 0
    %v1006 = vsel %vm1001, %v964, 0
    %v1009 = vsel %vm1001, %v965, 0
    %v1012 = vsel %vm1001, %v966, 0
    %v1015 = vsel %vm1001, %v967, 0
    %v1018 = vsel %vm1001, %v968, 0
    %v1021 = vsel %vm1001, %v969, 0
    %v1024 = vsel %vm1001, %v970, 0
    %v1027 = vsel %vm1001, %v971, 0
    %v1030 = vsel %vm1001, %v972, 0
    %v1033 = vsel %vm1001, %v973, 0
    %v1036 = vsel %vm1001, %v974, 0
    %v1039 = vsel %vm1001, %v975, 0
    %v1042 = vsel %vm1001, %v976, 0
    %v1045 = vsel %vm1001, %v977, 0
    %v1048 = vsel %vm1001, %v978, 0
    %v1051 = vsel %vm1001, %v979, 0
    %v1054 = vsel %vm1001, %v980, 0
    %v1057 = vsel %vm1001, %v981, 0
    %v1060 = vsel %vm1001, %v982, 0
    %v1063 = vsel %vm1001, %v983, 0
    %v1066 = vsel %vm1001, %v984, 0
    %v1069 = vsel %vm1001, %v985, 0
    %v1072 = vsel %vm1001, %v986, 0
    %v1075 = vsel %vm1001, %v987, 0
    %v1078 = vsel %vm1001, %v988, 0
    %v1081 = vsel %vm1001, %v989, 0
    %v1084 = vsel %vm1001, %v990, 0
    %v1087 = vsel %vm1001, %v991, 0
    %v1090 = vsel %vm1001, %v992, 0
    %v1093 = vsel %vm1001, %v993, 0
    %v1096 = vsel %vm1001, %v994, 0
    %1098 = vmatprep.subr.mxu0 0.0
    %1099 = vmatpush1.msra.mxu0 %v995
    %1100 = vmatprep.subr.mxu0 0.0
    %1101 = vmatpush1.msra.mxu0 %v996
    %1102 = vmatprep.subr.mxu0 0.0
    %1103 = vmatpush1.msra.mxu0 0.0
    %1104 = vmatprep.subr.mxu0 0.0
    %1105 = vmatpush1.msra.mxu0 0.0
    %1106 = vmatprep.subr.mxu0 0.0
    %1107 = vmatpush1.msra.mxu0 0.0
    %1108 = vmatprep.subr.mxu0 0.0
    %1109 = vmatpush1.msra.mxu0 0.0
    %1110 = vmatprep.subr.mxu0 0.0
    %1111 = vmatpush1.msra.mxu0 0.0
    %1112 = vmatprep.subr.mxu0 0.0
    %1113 = vmatpush1.msra.mxu0 0.0
    %1114 = vmatprep.subr.mxu0 0.0
    %1115 = vmatpush1.msra.mxu0 0.0
    %1116 = vmatprep.subr.mxu0 0.0
    %1117 = vmatpush1.msra.mxu0 0.0
    %1118 = vmatprep.subr.mxu0 0.0
    %1119 = vmatpush1.msra.mxu0 0.0
    %1120 = vmatprep.subr.mxu0 0.0
    %1121 = vmatpush1.msra.mxu0 0.0
    %1122 = vmatprep.subr.mxu0 0.0
    %1123 = vmatpush1.msra.mxu0 0.0
    %1124 = vmatprep.subr.mxu0 0.0
    %1125 = vmatpush1.msra.mxu0 0.0
    %1126 = vmatprep.subr.mxu0 0.0
    %1127 = vmatpush1.msra.mxu0 0.0
    %1128 = vmatprep.subr.mxu0 0.0
    %1129 = vmatpush1.msra.mxu0 0.0
    %1130 = vmatprep.subr.mxu0 0.0
    %1131 = vmatpush1.msra.mxu0 0.0
    %1132 = vmatprep.subr.mxu0 0.0
    %1133 = vmatpush1.msra.mxu0 0.0
    %1134 = vmatprep.subr.mxu0 0.0
    %1135 = vmatpush1.msra.mxu0 0.0
    %1136 = vmatprep.subr.mxu0 0.0
    %1137 = vmatpush1.msra.mxu0 0.0
    %1138 = vmatprep.subr.mxu0 0.0
    %1139 = vmatpush1.msra.mxu0 0.0
    %1140 = vmatprep.subr.mxu0 0.0
    %1141 = vmatpush1.msra.mxu0 0.0
    %1142 = vmatprep.subr.mxu0 0.0
    %1143 = vmatpush1.msra.mxu0 0.0
    %1144 = vmatprep.subr.mxu0 0.0
    %1145 = vmatpush1.msra.mxu0 0.0
    %1146 = vmatprep.subr.mxu0 0.0
    %1147 = vmatpush1.msra.mxu0 0.0
    %1148 = vmatprep.subr.mxu0 0.0
    %1149 = vmatpush1.msra.mxu0 0.0
    %1150 = vmatprep.subr.mxu0 0.0
    %1151 = vmatpush1.msra.mxu0 0.0
    %1152 = vmatprep.subr.mxu0 0.0
    %1153 = vmatpush1.msra.mxu0 0.0
    %1154 = vmatprep.subr.mxu0 0.0
    %1155 = vmatpush1.msra.mxu0 0.0
    %1156 = vmatprep.subr.mxu0 0.0
    %1157 = vmatpush1.msra.mxu0 0.0
    %1158 = vmatprep.subr.mxu0 0.0
    %1159 = vmatpush1.msra.mxu0 0.0
    %1160 = vmatprep.subr.mxu0 0.0
    %1161 = vmatpush1.msra.mxu0 0.0
    %1162 = vmatprep.mubr.f32.mxu0 0.0
    %1163 = vmatmul.mubr.f32.gmra.mrb[0].mxu0 %v1003
    %v1164 = vpop.f32.mrb[0].mxu0
    %v1165 = vadd.f32 %v1000, %v1164
    %v1166 = vpop.f32.mrb[0].mxu0
    %1167 = vmatprep.mubr.f32.mxu0 0.0
    %1168 = vmatmul.mubr.f32.gmra.mrb[0].mxu0 %v1006
    %v1169 = vpop.f32.mrb[0].mxu0
    %v1170 = vadd.f32 %v1000, %v1169
    %v1171 = vpop.f32.mrb[0].mxu0
    %1172 = vmatprep.mubr.f32.mxu0 0.0
    %1173 = vmatmul.mubr.f32.gmra.mrb[0].mxu0 %v1009
    %v1174 = vpop.f32.mrb[0].mxu0
    %v1175 = vadd.f32 %v1000, %v1174
    %v1176 = vpop.f32.mrb[0].mxu0
    %1177 = vmatprep.mubr.f32.mxu0 0.0
    %1178 = vmatmul.mubr.f32.gmra.mrb[0].mxu0 %v1012
    %v1179 = vpop.f32.mrb[0].mxu0
    %v1180 = vadd.f32 %v1000, %v1179
    %v1181 = vpop.f32.mrb[0].mxu0
    %1182 = vmatprep.mubr.f32.mxu0 0.0
    %1183 = vmatmul.mubr.f32.gmra.mrb[0].mxu0 %v1015
    %v1184 = vpop.f32.mrb[0].mxu0
    %v1185 = vadd.f32 %v1000, %v1184
    %v1186 = vpop.f32.mrb[0].mxu0
    %1187 = vmatprep.mubr.f32.mxu0 0.0
    %1188 = vmatmul.mubr.f32.gmra.mrb[0].mxu0 %v1018
    %v1189 = vpop.f32.mrb[0].mxu0
    %v1190 = vadd.f32 %v1000, %v1189
    %v1191 = vpop.f32.mrb[0].mxu0
    %1192 = vmatprep.mubr.f32.mxu0 0.0
    %1193 = vmatmul.mubr.f32.gmra.mrb[0].mxu0 %v1021
    %v1194 = vpop.f32.mrb[0].mxu0
    %v1195 = vadd.f32 %v1000, %v1194
    %v1196 = vpop.f32.mrb[0].mxu0
    %1197 = vmatprep.mubr.f32.mxu0 0.0
    %1198 = vmatmul.mubr.f32.gmra.mrb[0].mxu0 %v1024
    %v1199 = vpop.f32.mrb[0].mxu0
    %v1200 = vadd.f32 %v1000, %v1199
    %v1201 = vpop.f32.mrb[0].mxu0
    %1202 = vmatprep.mubr.f32.mxu0 0.0
    %1203 = vmatmul.mubr.f32.gmra.mrb[0].mxu0 %v1027
    %v1204 = vpop.f32.mrb[0].mxu0
    %v1205 = vadd.f32 %v1000, %v1204
    %v1206 = vpop.f32.mrb[0].mxu0
    %1207 = vmatprep.mubr.f32.mxu0 0.0
    %1208 = vmatmul.mubr.f32.gmra.mrb[0].mxu0 %v1030
    %v1209 = vpop.f32.mrb[0].mxu0
    %v1210 = vadd.f32 %v1000, %v1209
    %v1211 = vpop.f32.mrb[0].mxu0
    %1212 = vmatprep.mubr.f32.mxu0 0.0
    %1213 = vmatmul.mubr.f32.gmra.mrb[0].mxu0 %v1033
    %v1214 = vpop.f32.mrb[0].mxu0
    %v1215 = vadd.f32 %v1000, %v1214
    %v1216 = vpop.f32.mrb[0].mxu0
    %1217 = vmatprep.mubr.f32.mxu0 0.0
    %1218 = vmatmul.mubr.f32.gmra.mrb[0].mxu0 %v1036
    %v1219 = vpop.f32.mrb[0].mxu0
    %v1220 = vadd.f32 %v1000, %v1219
    %v1221 = vpop.f32.mrb[0].mxu0
    %1222 = vmatprep.mubr.f32.mxu0 0.0
    %1223 = vmatmul.mubr.f32.gmra.mrb[0].mxu0 %v1039
    %v1224 = vpop.f32.mrb[0].mxu0
    %v1225 = vadd.f32 %v1000, %v1224
    %v1226 = vpop.f32.mrb[0].mxu0
    %1227 = vmatprep.mubr.f32.mxu0 0.0
    %1228 = vmatmul.mubr.f32.gmra.mrb[0].mxu0 %v1042
    %v1229 = vpop.f32.mrb[0].mxu0
    %v1230 = vadd.f32 %v1000, %v1229
    %v1231 = vpop.f32.mrb[0].mxu0
    %1232 = vmatprep.mubr.f32.mxu0 0.0
    %1233 = vmatmul.mubr.f32.gmra.mrb[0].mxu0 %v1045
    %v1234 = vpop.f32.mrb[0].mxu0
    %v1235 = vadd.f32 %v1000, %v1234
    %v1236 = vpop.f32.mrb[0].mxu0
    %1237 = vmatprep.mubr.f32.mxu0 0.0
    %1238 = vmatmul.mubr.f32.gmra.mrb[0].mxu0 %v1048
    %v1239 = vpop.f32.mrb[0].mxu0
    %v1240 = vadd.f32 %v1000, %v1239
    %v1241 = vpop.f32.mrb[0].mxu0
    %1242 = vmatprep.mubr.f32.mxu0 0.0
    %1243 = vmatmul.mubr.f32.gmra.mrb[0].mxu0 %v1051
    %v1244 = vpop.f32.mrb[0].mxu0
    %v1245 = vadd.f32 %v1000, %v1244
    %v1246 = vpop.f32.mrb[0].mxu0
    %1247 = vmatprep.mubr.f32.mxu0 0.0
    %1248 = vmatmul.mubr.f32.gmra.mrb[0].mxu0 %v1054
    %v1249 = vpop.f32.mrb[0].mxu0
    %v1250 = vadd.f32 %v1000, %v1249
    %v1251 = vpop.f32.mrb[0].mxu0
    %1252 = vmatprep.mubr.f32.mxu0 0.0
    %1253 = vmatmul.mubr.f32.gmra.mrb[0].mxu0 %v1057
    %v1254 = vpop.f32.mrb[0].mxu0
    %v1255 = vadd.f32 %v1000, %v1254
    %v1256 = vpop.f32.mrb[0].mxu0
    %1257 = vmatprep.mubr.f32.mxu0 0.0
    %1258 = vmatmul.mubr.f32.gmra.mrb[0].mxu0 %v1060
    %v1259 = vpop.f32.mrb[0].mxu0
    %v1260 = vadd.f32 %v1000, %v1259
    %v1261 = vpop.f32.mrb[0].mxu0
    %1262 = vmatprep.mubr.f32.mxu0 0.0
    %1263 = vmatmul.mubr.f32.gmra.mrb[0].mxu0 %v1063
    %v1264 = vpop.f32.mrb[0].mxu0
    %v1265 = vadd.f32 %v1000, %v1264
    %v1266 = vpop.f32.mrb[0].mxu0
    %1267 = vmatprep.mubr.f32.mxu0 0.0
    %1268 = vmatmul.mubr.f32.gmra.mrb[0].mxu0 %v1066
    %v1269 = vpop.f32.mrb[0].mxu0
    %v1270 = vadd.f32 %v1000, %v1269
    %v1271 = vpop.f32.mrb[0].mxu0
    %1272 = vmatprep.mubr.f32.mxu0 0.0
    %1273 = vmatmul.mubr.f32.gmra.mrb[0].mxu0 %v1069
    %v1274 = vpop.f32.mrb[0].mxu0
    %v1275 = vadd.f32 %v1000, %v1274
    %v1276 = vpop.f32.mrb[0].mxu0
    %1277 = vmatprep.mubr.f32.mxu0 0.0
    %1278 = vmatmul.mubr.f32.gmra.mrb[0].mxu0 %v1072
    %v1279 = vpop.f32.mrb[0].mxu0
    %v1280 = vadd.f32 %v1000, %v1279
    %v1281 = vpop.f32.mrb[0].mxu0
    %1282 = vmatprep.mubr.f32.mxu0 0.0
    %1283 = vmatmul.mubr.f32.gmra.mrb[0].mxu0 %v1075
    %v1284 = vpop.f32.mrb[0].mxu0
    %v1285 = vadd.f32 %v1000, %v1284
    %v1286 = vpop.f32.mrb[0].mxu0
    %1287 = vmatprep.mubr.f32.mxu0 0.0
    %1288 = vmatmul.mubr.f32.gmra.mrb[0].mxu0 %v1078
    %v1289 = vpop.f32.mrb[0].mxu0
    %v1290 = vadd.f32 %v1000, %v1289
    %v1291 = vpop.f32.mrb[0].mxu0
    %1292 = vmatprep.mubr.f32.mxu0 0.0
    %1293 = vmatmul.mubr.f32.gmra.mrb[0].mxu0 %v1081
    %v1294 = vpop.f32.mrb[0].mxu0
    %v1295 = vadd.f32 %v1000, %v1294
    %v1296 = vpop.f32.mrb[0].mxu0
    %1297 = vmatprep.mubr.f32.mxu0 0.0
    %1298 = vmatmul.mubr.f32.gmra.mrb[0].mxu0 %v1084
    %v1299 = vpop.f32.mrb[0].mxu0
    %v1300 = vadd.f32 %v1000, %v1299
    %v1301 = vpop.f32.mrb[0].mxu0
    %1302 = vmatprep.mubr.f32.mxu0 0.0
    %1303 = vmatmul.mubr.f32.gmra.mrb[0].mxu0 %v1087
    %v1304 = vpop.f32.mrb[0].mxu0
    %v1305 = vadd.f32 %v1000, %v1304
    %v1306 = vpop.f32.mrb[0].mxu0
    %1307 = vmatprep.mubr.f32.mxu0 0.0
    %1308 = vmatmul.mubr.f32.gmra.mrb[0].mxu0 %v1090
    %v1309 = vpop.f32.mrb[0].mxu0
    %v1310 = vadd.f32 %v1000, %v1309
    %v1311 = vpop.f32.mrb[0].mxu0
    %1312 = vmatprep.mubr.f32.mxu0 0.0
    %1313 = vmatmul.mubr.f32.gmra.mrb[0].mxu0 %v1093
    %v1314 = vpop.f32.mrb[0].mxu0
    %v1315 = vadd.f32 %v1000, %v1314
    %v1316 = vpop.f32.mrb[0].mxu0
    %1317 = vmatprep.mubr.f32.mxu0 0.0
    %1318 = vmatmul.mubr.f32.gmra.mrb[0].mxu0 %v1096
    %v1319 = vpop.f32.mrb[0].mxu0
    %v1320 = vadd.f32 %v1000, %v1319
    %v1321 = vpop.f32.mrb[0].mxu0
    %1322 = vdwg.mxu0
    %v1323 = vmax.f32 %v1165, 0.0
    %v1324 = vmax.f32 %v1170, 0.0
    %v1325 = vmax.f32 %v1175, 0.0
    %v1326 = vmax.f32 %v1180, 0.0
    %v1327 = vmax.f32 %v1185, 0.0
    %v1328 = vmax.f32 %v1190, 0.0
    %v1329 = vmax.f32 %v1195, 0.0
    %v1330 = vmax.f32 %v1200, 0.0
    %v1331 = vmax.f32 %v1205, 0.0
    %v1332 = vmax.f32 %v1210, 0.0
    %v1333 = vmax.f32 %v1215, 0.0
    %v1334 = vmax.f32 %v1220, 0.0
    %v1335 = vmax.f32 %v1225, 0.0
    %v1336 = vmax.f32 %v1230, 0.0
    %v1337 = vmax.f32 %v1235, 0.0
    %v1338 = vmax.f32 %v1240, 0.0
    %v1339 = vmax.f32 %v1245, 0.0
    %v1340 = vmax.f32 %v1250, 0.0
    %v1341 = vmax.f32 %v1255, 0.0
    %v1342 = vmax.f32 %v1260, 0.0
    %v1343 = vmax.f32 %v1265, 0.0
    %v1344 = vmax.f32 %v1270, 0.0
    %v1345 = vmax.f32 %v1275, 0.0
    %v1346 = vmax.f32 %v1280, 0.0
    %v1347 = vmax.f32 %v1285, 0.0
    %v1348 = vmax.f32 %v1290, 0.0
    %v1349 = vmax.f32 %v1295, 0.0
    %v1350 = vmax.f32 %v1300, 0.0
    %v1351 = vmax.f32 %v1305, 0.0
    %v1352 = vmax.f32 %v1310, 0.0
    %v1353 = vmax.f32 %v1315, 0.0
    %v1354 = vmax.f32 %v1320, 0.0
    %v1355 = vld [vmem:[#allocation7] sm:$0xff]
    %v1356 = vld [vmem:[#allocation7 + $0x8] sm:$0xff]
    %v1357 = vld [vmem:[#allocation7 + $0x10] sm:$0xff]
    %v1358 = vld [vmem:[#allocation7 + $0x18] sm:$0xff]
    %v1359 = vld [vmem:[#allocation7 + $0x20] sm:$0xff]
    %v1360 = vld [vmem:[#allocation7 + $0x28] sm:$0xff]
    %v1361 = vld [vmem:[#allocation7 + $0x30] sm:$0xff]
    %v1362 = vld [vmem:[#allocation7 + $0x38] sm:$0xff]
    %v1363 = vld [vmem:[#allocation7 + $0x40] sm:$0xff]
    %v1364 = vld [vmem:[#allocation7 + $0x48] sm:$0xff]
    %v1365 = vld [vmem:[#allocation7 + $0x50] sm:$0xff]
    %v1366 = vld [vmem:[#allocation7 + $0x58] sm:$0xff]
    %v1367 = vld [vmem:[#allocation7 + $0x60] sm:$0xff]
    %v1368 = vld [vmem:[#allocation7 + $0x68] sm:$0xff]
    %v1369 = vld [vmem:[#allocation7 + $0x70] sm:$0xff]
    %v1370 = vld [vmem:[#allocation7 + $0x78] sm:$0xff]
    %v1371 = vld [vmem:[#allocation7 + $0x80] sm:$0xff]
    %v1372 = vld [vmem:[#allocation7 + $0x88] sm:$0xff]
    %v1373 = vld [vmem:[#allocation7 + $0x90] sm:$0xff]
    %v1374 = vld [vmem:[#allocation7 + $0x98] sm:$0xff]
    %v1375 = vld [vmem:[#allocation7 + $0xa0] sm:$0xff]
    %v1376 = vld [vmem:[#allocation7 + $0xa8] sm:$0xff]
    %v1377 = vld [vmem:[#allocation7 + $0xb0] sm:$0xff]
    %v1378 = vld [vmem:[#allocation7 + $0xb8] sm:$0xff]
    %v1379 = vld [vmem:[#allocation7 + $0xc0] sm:$0xff]
    %v1380 = vld [vmem:[#allocation7 + $0xc8] sm:$0xff]
    %v1381 = vld [vmem:[#allocation7 + $0xd0] sm:$0xff]
    %v1382 = vld [vmem:[#allocation7 + $0xd8] sm:$0xff]
    %v1383 = vld [vmem:[#allocation7 + $0xe0] sm:$0xff]
    %v1384 = vld [vmem:[#allocation7 + $0xe8] sm:$0xff]
    %v1385 = vld [vmem:[#allocation7 + $0xf0] sm:$0xff]
    %v1386 = vld [vmem:[#allocation7 + $0xf8] sm:$0xff]
    %v1388 = vlaneseq
    %v1389 = vshrl.u32 %v1388, 7
    %v1390 = vsub.s32 0, %v1389
    %v1391 = vrot.slane %v168, %v1390
    %v1392 = vlaneseq
    %v1393 = vshrl.u32 %v1392, 7
    %v1394 = vsub.s32 1, %v1393
    %v1395 = vrot.slane %v168, %v1394
    %1398 = vmatprep.subr.mxu0 %v1356
    %1399 = vmatpush1.msra.mxu0 %v1355
    %1400 = vmatprep.subr.mxu0 %v1358
    %1401 = vmatpush1.msra.mxu0 %v1357
    %1402 = vmatprep.subr.mxu0 %v1360
    %1403 = vmatpush1.msra.mxu0 %v1359
    %1404 = vmatprep.subr.mxu0 %v1362
    %1405 = vmatpush1.msra.mxu0 %v1361
    %1406 = vmatprep.subr.mxu0 %v1364
    %1407 = vmatpush1.msra.mxu0 %v1363
    %1408 = vmatprep.subr.mxu0 %v1366
    %1409 = vmatpush1.msra.mxu0 %v1365
    %1410 = vmatprep.subr.mxu0 %v1368
    %1411 = vmatpush1.msra.mxu0 %v1367
    %1412 = vmatprep.subr.mxu0 %v1370
    %1413 = vmatpush1.msra.mxu0 %v1369
    %1414 = vmatprep.subr.mxu0 %v1372
    %1415 = vmatpush1.msra.mxu0 %v1371
    %1416 = vmatprep.subr.mxu0 %v1374
    %1417 = vmatpush1.msra.mxu0 %v1373
    %1418 = vmatprep.subr.mxu0 %v1376
    %1419 = vmatpush1.msra.mxu0 %v1375
    %1420 = vmatprep.subr.mxu0 %v1378
    %1421 = vmatpush1.msra.mxu0 %v1377
    %1422 = vmatprep.subr.mxu0 %v1380
    %1423 = vmatpush1.msra.mxu0 %v1379
    %1424 = vmatprep.subr.mxu0 %v1382
    %1425 = vmatpush1.msra.mxu0 %v1381
    %1426 = vmatprep.subr.mxu0 %v1384
    %1427 = vmatpush1.msra.mxu0 %v1383
    %1428 = vmatprep.subr.mxu0 %v1386
    %1429 = vmatpush1.msra.mxu0 %v1385
    %1430 = vmatprep.subr.mxu0 0.0
    %1431 = vmatpush1.msra.mxu0 0.0
    %1432 = vmatprep.subr.mxu0 0.0
    %1433 = vmatpush1.msra.mxu0 0.0
    %1434 = vmatprep.subr.mxu0 0.0
    %1435 = vmatpush1.msra.mxu0 0.0
    %1436 = vmatprep.subr.mxu0 0.0
    %1437 = vmatpush1.msra.mxu0 0.0
    %1438 = vmatprep.subr.mxu0 0.0
    %1439 = vmatpush1.msra.mxu0 0.0
    %1440 = vmatprep.subr.mxu0 0.0
    %1441 = vmatpush1.msra.mxu0 0.0
    %1442 = vmatprep.subr.mxu0 0.0
    %1443 = vmatpush1.msra.mxu0 0.0
    %1444 = vmatprep.subr.mxu0 0.0
    %1445 = vmatpush1.msra.mxu0 0.0
    %1446 = vmatprep.subr.mxu0 0.0
    %1447 = vmatpush1.msra.mxu0 0.0
    %1448 = vmatprep.subr.mxu0 0.0
    %1449 = vmatpush1.msra.mxu0 0.0
    %1450 = vmatprep.subr.mxu0 0.0
    %1451 = vmatpush1.msra.mxu0 0.0
    %1452 = vmatprep.subr.mxu0 0.0
    %1453 = vmatpush1.msra.mxu0 0.0
    %1454 = vmatprep.subr.mxu0 0.0
    %1455 = vmatpush1.msra.mxu0 0.0
    %1456 = vmatprep.subr.mxu0 0.0
    %1457 = vmatpush1.msra.mxu0 0.0
    %1458 = vmatprep.subr.mxu0 0.0
    %1459 = vmatpush1.msra.mxu0 0.0
    %1460 = vmatprep.subr.mxu0 0.0
    %1461 = vmatpush1.msra.mxu0 0.0
    %1462 = vmatprep.mubr.f32.mxu0 0.0
    %1463 = vmatmul.mubr.f32.gmra.mrb[0].mxu0 %v1323
    %v1464 = vpop.f32.mrb[0].mxu0
    %v1465 = vadd.f32 %v1391, %v1464
    %v1466 = vpop.f32.mrb[0].mxu0
    %v1467 = vadd.f32 %v1395, %v1466
    %1468 = vmatprep.mubr.f32.mxu0 0.0
    %1469 = vmatmul.mubr.f32.gmra.mrb[0].mxu0 %v1324
    %v1470 = vpop.f32.mrb[0].mxu0
    %v1471 = vadd.f32 %v1391, %v1470
    %v1472 = vpop.f32.mrb[0].mxu0
    %v1473 = vadd.f32 %v1395, %v1472
    %1474 = vmatprep.mubr.f32.mxu0 0.0
    %1475 = vmatmul.mubr.f32.gmra.mrb[0].mxu0 %v1325
    %v1476 = vpop.f32.mrb[0].mxu0
    %v1477 = vadd.f32 %v1391, %v1476
    %v1478 = vpop.f32.mrb[0].mxu0
    %v1479 = vadd.f32 %v1395, %v1478
    %1480 = vmatprep.mubr.f32.mxu0 0.0
    %1481 = vmatmul.mubr.f32.gmra.mrb[0].mxu0 %v1326
    %v1482 = vpop.f32.mrb[0].mxu0
    %v1483 = vadd.f32 %v1391, %v1482
    %v1484 = vpop.f32.mrb[0].mxu0
    %v1485 = vadd.f32 %v1395, %v1484
    %1486 = vmatprep.mubr.f32.mxu0 0.0
    %1487 = vmatmul.mubr.f32.gmra.mrb[0].mxu0 %v1327
    %v1488 = vpop.f32.mrb[0].mxu0
    %v1489 = vadd.f32 %v1391, %v1488
    %v1490 = vpop.f32.mrb[0].mxu0
    %v1491 = vadd.f32 %v1395, %v1490
    %1492 = vmatprep.mubr.f32.mxu0 0.0
    %1493 = vmatmul.mubr.f32.gmra.mrb[0].mxu0 %v1328
    %v1494 = vpop.f32.mrb[0].mxu0
    %v1495 = vadd.f32 %v1391, %v1494
    %v1496 = vpop.f32.mrb[0].mxu0
    %v1497 = vadd.f32 %v1395, %v1496
    %1498 = vmatprep.mubr.f32.mxu0 0.0
    %1499 = vmatmul.mubr.f32.gmra.mrb[0].mxu0 %v1329
    %v1500 = vpop.f32.mrb[0].mxu0
    %v1501 = vadd.f32 %v1391, %v1500
    %v1502 = vpop.f32.mrb[0].mxu0
    %v1503 = vadd.f32 %v1395, %v1502
    %1504 = vmatprep.mubr.f32.mxu0 0.0
    %1505 = vmatmul.mubr.f32.gmra.mrb[0].mxu0 %v1330
    %v1506 = vpop.f32.mrb[0].mxu0
    %v1507 = vadd.f32 %v1391, %v1506
    %v1508 = vpop.f32.mrb[0].mxu0
    %v1509 = vadd.f32 %v1395, %v1508
    %1510 = vmatprep.mubr.f32.mxu0 0.0
    %1511 = vmatmul.mubr.f32.gmra.mrb[0].mxu0 %v1331
    %v1512 = vpop.f32.mrb[0].mxu0
    %v1513 = vadd.f32 %v1391, %v1512
    %v1514 = vpop.f32.mrb[0].mxu0
    %v1515 = vadd.f32 %v1395, %v1514
    %1516 = vmatprep.mubr.f32.mxu0 0.0
    %1517 = vmatmul.mubr.f32.gmra.mrb[0].mxu0 %v1332
    %v1518 = vpop.f32.mrb[0].mxu0
    %v1519 = vadd.f32 %v1391, %v1518
    %v1520 = vpop.f32.mrb[0].mxu0
    %v1521 = vadd.f32 %v1395, %v1520
    %1522 = vmatprep.mubr.f32.mxu0 0.0
    %1523 = vmatmul.mubr.f32.gmra.mrb[0].mxu0 %v1333
    %v1524 = vpop.f32.mrb[0].mxu0
    %v1525 = vadd.f32 %v1391, %v1524
    %v1526 = vpop.f32.mrb[0].mxu0
    %v1527 = vadd.f32 %v1395, %v1526
    %1528 = vmatprep.mubr.f32.mxu0 0.0
    %1529 = vmatmul.mubr.f32.gmra.mrb[0].mxu0 %v1334
    %v1530 = vpop.f32.mrb[0].mxu0
    %v1531 = vadd.f32 %v1391, %v1530
    %v1532 = vpop.f32.mrb[0].mxu0
    %v1533 = vadd.f32 %v1395, %v1532
    %1534 = vmatprep.mubr.f32.mxu0 0.0
    %1535 = vmatmul.mubr.f32.gmra.mrb[0].mxu0 %v1335
    %v1536 = vpop.f32.mrb[0].mxu0
    %v1537 = vadd.f32 %v1391, %v1536
    %v1538 = vpop.f32.mrb[0].mxu0
    %v1539 = vadd.f32 %v1395, %v1538
    %1540 = vmatprep.mubr.f32.mxu0 0.0
    %1541 = vmatmul.mubr.f32.gmra.mrb[0].mxu0 %v1336
    %v1542 = vpop.f32.mrb[0].mxu0
    %v1543 = vadd.f32 %v1391, %v1542
    %v1544 = vpop.f32.mrb[0].mxu0
    %v1545 = vadd.f32 %v1395, %v1544
    %1546 = vmatprep.mubr.f32.mxu0 0.0
    %1547 = vmatmul.mubr.f32.gmra.mrb[0].mxu0 %v1337
    %v1548 = vpop.f32.mrb[0].mxu0
    %v1549 = vadd.f32 %v1391, %v1548
    %v1550 = vpop.f32.mrb[0].mxu0
    %v1551 = vadd.f32 %v1395, %v1550
    %1552 = vmatprep.mubr.f32.mxu0 0.0
    %1553 = vmatmul.mubr.f32.gmra.mrb[0].mxu0 %v1338
    %v1554 = vpop.f32.mrb[0].mxu0
    %v1555 = vadd.f32 %v1391, %v1554
    %v1556 = vpop.f32.mrb[0].mxu0
    %v1557 = vadd.f32 %v1395, %v1556
    %1558 = vmatprep.mubr.f32.mxu0 0.0
    %1559 = vmatmul.mubr.f32.gmra.mrb[0].mxu0 %v1339
    %v1560 = vpop.f32.mrb[0].mxu0
    %v1561 = vadd.f32 %v1391, %v1560
    %v1562 = vpop.f32.mrb[0].mxu0
    %v1563 = vadd.f32 %v1395, %v1562
    %1564 = vmatprep.mubr.f32.mxu0 0.0
    %1565 = vmatmul.mubr.f32.gmra.mrb[0].mxu0 %v1340
    %v1566 = vpop.f32.mrb[0].mxu0
    %v1567 = vadd.f32 %v1391, %v1566
    %v1568 = vpop.f32.mrb[0].mxu0
    %v1569 = vadd.f32 %v1395, %v1568
    %1570 = vmatprep.mubr.f32.mxu0 0.0
    %1571 = vmatmul.mubr.f32.gmra.mrb[0].mxu0 %v1341
    %v1572 = vpop.f32.mrb[0].mxu0
    %v1573 = vadd.f32 %v1391, %v1572
    %v1574 = vpop.f32.mrb[0].mxu0
    %v1575 = vadd.f32 %v1395, %v1574
    %1576 = vmatprep.mubr.f32.mxu0 0.0
    %1577 = vmatmul.mubr.f32.gmra.mrb[0].mxu0 %v1342
    %v1578 = vpop.f32.mrb[0].mxu0
    %v1579 = vadd.f32 %v1391, %v1578
    %v1580 = vpop.f32.mrb[0].mxu0
    %v1581 = vadd.f32 %v1395, %v1580
    %1582 = vmatprep.mubr.f32.mxu0 0.0
    %1583 = vmatmul.mubr.f32.gmra.mrb[0].mxu0 %v1343
    %v1584 = vpop.f32.mrb[0].mxu0
    %v1585 = vadd.f32 %v1391, %v1584
    %v1586 = vpop.f32.mrb[0].mxu0
    %v1587 = vadd.f32 %v1395, %v1586
    %1588 = vmatprep.mubr.f32.mxu0 0.0
    %1589 = vmatmul.mubr.f32.gmra.mrb[0].mxu0 %v1344
    %v1590 = vpop.f32.mrb[0].mxu0
    %v1591 = vadd.f32 %v1391, %v1590
    %v1592 = vpop.f32.mrb[0].mxu0
    %v1593 = vadd.f32 %v1395, %v1592
    %1594 = vmatprep.mubr.f32.mxu0 0.0
    %1595 = vmatmul.mubr.f32.gmra.mrb[0].mxu0 %v1345
    %v1596 = vpop.f32.mrb[0].mxu0
    %v1597 = vadd.f32 %v1391, %v1596
    %v1598 = vpop.f32.mrb[0].mxu0
    %v1599 = vadd.f32 %v1395, %v1598
    %1600 = vmatprep.mubr.f32.mxu0 0.0
    %1601 = vmatmul.mubr.f32.gmra.mrb[0].mxu0 %v1346
    %v1602 = vpop.f32.mrb[0].mxu0
    %v1603 = vadd.f32 %v1391, %v1602
    %v1604 = vpop.f32.mrb[0].mxu0
    %v1605 = vadd.f32 %v1395, %v1604
    %1606 = vmatprep.mubr.f32.mxu0 0.0
    %1607 = vmatmul.mubr.f32.gmra.mrb[0].mxu0 %v1347
    %v1608 = vpop.f32.mrb[0].mxu0
    %v1609 = vadd.f32 %v1391, %v1608
    %v1610 = vpop.f32.mrb[0].mxu0
    %v1611 = vadd.f32 %v1395, %v1610
    %1612 = vmatprep.mubr.f32.mxu0 0.0
    %1613 = vmatmul.mubr.f32.gmra.mrb[0].mxu0 %v1348
    %v1614 = vpop.f32.mrb[0].mxu0
    %v1615 = vadd.f32 %v1391, %v1614
    %v1616 = vpop.f32.mrb[0].mxu0
    %v1617 = vadd.f32 %v1395, %v1616
    %1618 = vmatprep.mubr.f32.mxu0 0.0
    %1619 = vmatmul.mubr.f32.gmra.mrb[0].mxu0 %v1349
    %v1620 = vpop.f32.mrb[0].mxu0
    %v1621 = vadd.f32 %v1391, %v1620
    %v1622 = vpop.f32.mrb[0].mxu0
    %v1623 = vadd.f32 %v1395, %v1622
    %1624 = vmatprep.mubr.f32.mxu0 0.0
    %1625 = vmatmul.mubr.f32.gmra.mrb[0].mxu0 %v1350
    %v1626 = vpop.f32.mrb[0].mxu0
    %v1627 = vadd.f32 %v1391, %v1626
    %v1628 = vpop.f32.mrb[0].mxu0
    %v1629 = vadd.f32 %v1395, %v1628
    %1630 = vmatprep.mubr.f32.mxu0 0.0
    %1631 = vmatmul.mubr.f32.gmra.mrb[0].mxu0 %v1351
    %v1632 = vpop.f32.mrb[0].mxu0
    %v1633 = vadd.f32 %v1391, %v1632
    %v1634 = vpop.f32.mrb[0].mxu0
    %v1635 = vadd.f32 %v1395, %v1634
    %1636 = vmatprep.mubr.f32.mxu0 0.0
    %1637 = vmatmul.mubr.f32.gmra.mrb[0].mxu0 %v1352
    %v1638 = vpop.f32.mrb[0].mxu0
    %v1639 = vadd.f32 %v1391, %v1638
    %v1640 = vpop.f32.mrb[0].mxu0
    %v1641 = vadd.f32 %v1395, %v1640
    %1642 = vmatprep.mubr.f32.mxu0 0.0
    %1643 = vmatmul.mubr.f32.gmra.mrb[0].mxu0 %v1353
    %v1644 = vpop.f32.mrb[0].mxu0
    %v1645 = vadd.f32 %v1391, %v1644
    %v1646 = vpop.f32.mrb[0].mxu0
    %v1647 = vadd.f32 %v1395, %v1646
    %1648 = vmatprep.mubr.f32.mxu0 0.0
    %1649 = vmatmul.mubr.f32.gmra.mrb[0].mxu0 %v1354
    %v1650 = vpop.f32.mrb[0].mxu0
    %v1651 = vadd.f32 %v1391, %v1650
    %v1652 = vpop.f32.mrb[0].mxu0
    %v1653 = vadd.f32 %v1395, %v1652
    %1654 = vdwg.mxu0
    %v1655 = vsub.f32 0.0, %v1465
    %v1656 = vsub.f32 0.0, %v1467
    %v1657 = vsub.f32 0.0, %v1471
    %v1658 = vsub.f32 0.0, %v1473
    %v1659 = vsub.f32 0.0, %v1477
    %v1660 = vsub.f32 0.0, %v1479
    %v1661 = vsub.f32 0.0, %v1483
    %v1662 = vsub.f32 0.0, %v1485
    %v1663 = vsub.f32 0.0, %v1489
    %v1664 = vsub.f32 0.0, %v1491
    %v1665 = vsub.f32 0.0, %v1495
    %v1666 = vsub.f32 0.0, %v1497
    %v1667 = vsub.f32 0.0, %v1501
    %v1668 = vsub.f32 0.0, %v1503
    %v1669 = vsub.f32 0.0, %v1507
    %v1670 = vsub.f32 0.0, %v1509
    %v1671 = vsub.f32 0.0, %v1513
    %v1672 = vsub.f32 0.0, %v1515
    %v1673 = vsub.f32 0.0, %v1519
    %v1674 = vsub.f32 0.0, %v1521
    %v1675 = vsub.f32 0.0, %v1525
    %v1676 = vsub.f32 0.0, %v1527
    %v1677 = vsub.f32 0.0, %v1531
    %v1678 = vsub.f32 0.0, %v1533
    %v1679 = vsub.f32 0.0, %v1537
    %v1680 = vsub.f32 0.0, %v1539
    %v1681 = vsub.f32 0.0, %v1543
    %v1682 = vsub.f32 0.0, %v1545
    %v1683 = vsub.f32 0.0, %v1549
    %v1684 = vsub.f32 0.0, %v1551
    %v1685 = vsub.f32 0.0, %v1555
    %v1686 = vsub.f32 0.0, %v1557
    %v1687 = vsub.f32 0.0, %v1561
    %v1688 = vsub.f32 0.0, %v1563
    %v1689 = vsub.f32 0.0, %v1567
    %v1690 = vsub.f32 0.0, %v1569
    %v1691 = vsub.f32 0.0, %v1573
    %v1692 = vsub.f32 0.0, %v1575
    %v1693 = vsub.f32 0.0, %v1579
    %v1694 = vsub.f32 0.0, %v1581
    %v1695 = vsub.f32 0.0, %v1585
    %v1696 = vsub.f32 0.0, %v1587
    %v1697 = vsub.f32 0.0, %v1591
    %v1698 = vsub.f32 0.0, %v1593
    %v1699 = vsub.f32 0.0, %v1597
    %v1700 = vsub.f32 0.0, %v1599
    %v1701 = vsub.f32 0.0, %v1603
    %v1702 = vsub.f32 0.0, %v1605
    %v1703 = vsub.f32 0.0, %v1609
    %v1704 = vsub.f32 0.0, %v1611
    %v1705 = vsub.f32 0.0, %v1615
    %v1706 = vsub.f32 0.0, %v1617
    %v1707 = vsub.f32 0.0, %v1621
    %v1708 = vsub.f32 0.0, %v1623
    %v1709 = vsub.f32 0.0, %v1627
    %v1710 = vsub.f32 0.0, %v1629
    %v1711 = vsub.f32 0.0, %v1633
    %v1712 = vsub.f32 0.0, %v1635
    %v1713 = vsub.f32 0.0, %v1639
    %v1714 = vsub.f32 0.0, %v1641
    %v1715 = vsub.f32 0.0, %v1645
    %v1716 = vsub.f32 0.0, %v1647
    %v1717 = vsub.f32 0.0, %v1651
    %v1718 = vsub.f32 0.0, %v1653
    %v1719 = vmul.f32 %v1655, 1.442695
    %v1720 = vpow.pop %v1719
    %v1721 = vmul.f32 %v1656, 1.442695
    %v1722 = vpow.pop %v1721
    %v1723 = vmul.f32 %v1657, 1.442695
    %v1724 = vpow.pop %v1723
    %v1725 = vmul.f32 %v1658, 1.442695
    %v1726 = vpow.pop %v1725
    %v1727 = vmul.f32 %v1659, 1.442695
    %v1728 = vpow.pop %v1727
    %v1729 = vmul.f32 %v1660, 1.442695
    %v1730 = vpow.pop %v1729
    %v1731 = vmul.f32 %v1661, 1.442695
    %v1732 = vpow.pop %v1731
    %v1733 = vmul.f32 %v1662, 1.442695
    %v1734 = vpow.pop %v1733
    %v1735 = vmul.f32 %v1663, 1.442695
    %v1736 = vpow.pop %v1735
    %v1737 = vmul.f32 %v1664, 1.442695
    %v1738 = vpow.pop %v1737
    %v1739 = vmul.f32 %v1665, 1.442695
    %v1740 = vpow.pop %v1739
    %v1741 = vmul.f32 %v1666, 1.442695
    %v1742 = vpow.pop %v1741
    %v1743 = vmul.f32 %v1667, 1.442695
    %v1744 = vpow.pop %v1743
    %v1745 = vmul.f32 %v1668, 1.442695
    %v1746 = vpow.pop %v1745
    %v1747 = vmul.f32 %v1669, 1.442695
    %v1748 = vpow.pop %v1747
    %v1749 = vmul.f32 %v1670, 1.442695
    %v1750 = vpow.pop %v1749
    %v1751 = vmul.f32 %v1671, 1.442695
    %v1752 = vpow.pop %v1751
    %v1753 = vmul.f32 %v1672, 1.442695
    %v1754 = vpow.pop %v1753
    %v1755 = vmul.f32 %v1673, 1.442695
    %v1756 = vpow.pop %v1755
    %v1757 = vmul.f32 %v1674, 1.442695
    %v1758 = vpow.pop %v1757
    %v1759 = vmul.f32 %v1675, 1.442695
    %v1760 = vpow.pop %v1759
    %v1761 = vmul.f32 %v1676, 1.442695
    %v1762 = vpow.pop %v1761
    %v1763 = vmul.f32 %v1677, 1.442695
    %v1764 = vpow.pop %v1763
    %v1765 = vmul.f32 %v1678, 1.442695
    %v1766 = vpow.pop %v1765
    %v1767 = vmul.f32 %v1679, 1.442695
    %v1768 = vpow.pop %v1767
    %v1769 = vmul.f32 %v1680, 1.442695
    %v1770 = vpow.pop %v1769
    %v1771 = vmul.f32 %v1681, 1.442695
    %v1772 = vpow.pop %v1771
    %v1773 = vmul.f32 %v1682, 1.442695
    %v1774 = vpow.pop %v1773
    %v1775 = vmul.f32 %v1683, 1.442695
    %v1776 = vpow.pop %v1775
    %v1777 = vmul.f32 %v1684, 1.442695
    %v1778 = vpow.pop %v1777
    %v1779 = vmul.f32 %v1685, 1.442695
    %v1780 = vpow.pop %v1779
    %v1781 = vmul.f32 %v1686, 1.442695
    %v1782 = vpow.pop %v1781
    %v1783 = vmul.f32 %v1687, 1.442695
    %v1784 = vpow.pop %v1783
    %v1785 = vmul.f32 %v1688, 1.442695
    %v1786 = vpow.pop %v1785
    %v1787 = vmul.f32 %v1689, 1.442695
    %v1788 = vpow.pop %v1787
    %v1789 = vmul.f32 %v1690, 1.442695
    %v1790 = vpow.pop %v1789
    %v1791 = vmul.f32 %v1691, 1.442695
    %v1792 = vpow.pop %v1791
    %v1793 = vmul.f32 %v1692, 1.442695
    %v1794 = vpow.pop %v1793
    %v1795 = vmul.f32 %v1693, 1.442695
    %v1796 = vpow.pop %v1795
    %v1797 = vmul.f32 %v1694, 1.442695
    %v1798 = vpow.pop %v1797
    %v1799 = vmul.f32 %v1695, 1.442695
    %v1800 = vpow.pop %v1799
    %v1801 = vmul.f32 %v1696, 1.442695
    %v1802 = vpow.pop %v1801
    %v1803 = vmul.f32 %v1697, 1.442695
    %v1804 = vpow.pop %v1803
    %v1805 = vmul.f32 %v1698, 1.442695
    %v1806 = vpow.pop %v1805
    %v1807 = vmul.f32 %v1699, 1.442695
    %v1808 = vpow.pop %v1807
    %v1809 = vmul.f32 %v1700, 1.442695
    %v1810 = vpow.pop %v1809
    %v1811 = vmul.f32 %v1701, 1.442695
    %v1812 = vpow.pop %v1811
    %v1813 = vmul.f32 %v1702, 1.442695
    %v1814 = vpow.pop %v1813
    %v1815 = vmul.f32 %v1703, 1.442695
    %v1816 = vpow.pop %v1815
    %v1817 = vmul.f32 %v1704, 1.442695
    %v1818 = vpow.pop %v1817
    %v1819 = vmul.f32 %v1705, 1.442695
    %v1820 = vpow.pop %v1819
    %v1821 = vmul.f32 %v1706, 1.442695
    %v1822 = vpow.pop %v1821
    %v1823 = vmul.f32 %v1707, 1.442695
    %v1824 = vpow.pop %v1823
    %v1825 = vmul.f32 %v1708, 1.442695
    %v1826 = vpow.pop %v1825
    %v1827 = vmul.f32 %v1709, 1.442695
    %v1828 = vpow.pop %v1827
    %v1829 = vmul.f32 %v1710, 1.442695
    %v1830 = vpow.pop %v1829
    %v1831 = vmul.f32 %v1711, 1.442695
    %v1832 = vpow.pop %v1831
    %v1833 = vmul.f32 %v1712, 1.442695
    %v1834 = vpow.pop %v1833
    %v1835 = vmul.f32 %v1713, 1.442695
    %v1836 = vpow.pop %v1835
    %v1837 = vmul.f32 %v1714, 1.442695
    %v1838 = vpow.pop %v1837
    %v1839 = vmul.f32 %v1715, 1.442695
    %v1840 = vpow.pop %v1839
    %v1841 = vmul.f32 %v1716, 1.442695
    %v1842 = vpow.pop %v1841
    %v1843 = vmul.f32 %v1717, 1.442695
    %v1844 = vpow.pop %v1843
    %v1845 = vmul.f32 %v1718, 1.442695
    %v1846 = vpow.pop %v1845
    %v1847 = vadd.f32 %v1720, 1.0
    %v1848 = vadd.f32 %v1722, 1.0
    %v1849 = vadd.f32 %v1724, 1.0
    %v1850 = vadd.f32 %v1726, 1.0
    %v1851 = vadd.f32 %v1728, 1.0
    %v1852 = vadd.f32 %v1730, 1.0
    %v1853 = vadd.f32 %v1732, 1.0
    %v1854 = vadd.f32 %v1734, 1.0
    %v1855 = vadd.f32 %v1736, 1.0
    %v1856 = vadd.f32 %v1738, 1.0
    %v1857 = vadd.f32 %v1740, 1.0
    %v1858 = vadd.f32 %v1742, 1.0
    %v1859 = vadd.f32 %v1744, 1.0
    %v1860 = vadd.f32 %v1746, 1.0
    %v1861 = vadd.f32 %v1748, 1.0
    %v1862 = vadd.f32 %v1750, 1.0
    %v1863 = vadd.f32 %v1752, 1.0
    %v1864 = vadd.f32 %v1754, 1.0
    %v1865 = vadd.f32 %v1756, 1.0
    %v1866 = vadd.f32 %v1758, 1.0
    %v1867 = vadd.f32 %v1760, 1.0
    %v1868 = vadd.f32 %v1762, 1.0
    %v1869 = vadd.f32 %v1764, 1.0
    %v1870 = vadd.f32 %v1766, 1.0
    %v1871 = vadd.f32 %v1768, 1.0
    %v1872 = vadd.f32 %v1770, 1.0
    %v1873 = vadd.f32 %v1772, 1.0
    %v1874 = vadd.f32 %v1774, 1.0
    %v1875 = vadd.f32 %v1776, 1.0
    %v1876 = vadd.f32 %v1778, 1.0
    %v1877 = vadd.f32 %v1780, 1.0
    %v1878 = vadd.f32 %v1782, 1.0
    %v1879 = vadd.f32 %v1784, 1.0
    %v1880 = vadd.f32 %v1786, 1.0
    %v1881 = vadd.f32 %v1788, 1.0
    %v1882 = vadd.f32 %v1790, 1.0
    %v1883 = vadd.f32 %v1792, 1.0
    %v1884 = vadd.f32 %v1794, 1.0
    %v1885 = vadd.f32 %v1796, 1.0
    %v1886 = vadd.f32 %v1798, 1.0
    %v1887 = vadd.f32 %v1800, 1.0
    %v1888 = vadd.f32 %v1802, 1.0
    %v1889 = vadd.f32 %v1804, 1.0
    %v1890 = vadd.f32 %v1806, 1.0
    %v1891 = vadd.f32 %v1808, 1.0
    %v1892 = vadd.f32 %v1810, 1.0
    %v1893 = vadd.f32 %v1812, 1.0
    %v1894 = vadd.f32 %v1814, 1.0
    %v1895 = vadd.f32 %v1816, 1.0
    %v1896 = vadd.f32 %v1818, 1.0
    %v1897 = vadd.f32 %v1820, 1.0
    %v1898 = vadd.f32 %v1822, 1.0
    %v1899 = vadd.f32 %v1824, 1.0
    %v1900 = vadd.f32 %v1826, 1.0
    %v1901 = vadd.f32 %v1828, 1.0
    %v1902 = vadd.f32 %v1830, 1.0
    %v1903 = vadd.f32 %v1832, 1.0
    %v1904 = vadd.f32 %v1834, 1.0
    %v1905 = vadd.f32 %v1836, 1.0
    %v1906 = vadd.f32 %v1838, 1.0
    %v1907 = vadd.f32 %v1840, 1.0
    %v1908 = vadd.f32 %v1842, 1.0
    %v1909 = vadd.f32 %v1844, 1.0
    %v1910 = vadd.f32 %v1846, 1.0
    %v1911 = vrcp.pop %v1847
    %v1912 = vrcp.pop %v1848
    %v1913 = vrcp.pop %v1849
    %v1914 = vrcp.pop %v1850
    %v1915 = vrcp.pop %v1851
    %v1916 = vrcp.pop %v1852
    %v1917 = vrcp.pop %v1853
    %v1918 = vrcp.pop %v1854
    %v1919 = vrcp.pop %v1855
    %v1920 = vrcp.pop %v1856
    %v1921 = vrcp.pop %v1857
    %v1922 = vrcp.pop %v1858
    %v1923 = vrcp.pop %v1859
    %v1924 = vrcp.pop %v1860
    %v1925 = vrcp.pop %v1861
    %v1926 = vrcp.pop %v1862
    %v1927 = vrcp.pop %v1863
    %v1928 = vrcp.pop %v1864
    %v1929 = vrcp.pop %v1865
    %v1930 = vrcp.pop %v1866
    %v1931 = vrcp.pop %v1867
    %v1932 = vrcp.pop %v1868
    %v1933 = vrcp.pop %v1869
    %v1934 = vrcp.pop %v1870
    %v1935 = vrcp.pop %v1871
    %v1936 = vrcp.pop %v1872
    %v1937 = vrcp.pop %v1873
    %v1938 = vrcp.pop %v1874
    %v1939 = vrcp.pop %v1875
    %v1940 = vrcp.pop %v1876
    %v1941 = vrcp.pop %v1877
    %v1942 = vrcp.pop %v1878
    %v1943 = vrcp.pop %v1879
    %v1944 = vrcp.pop %v1880
    %v1945 = vrcp.pop %v1881
    %v1946 = vrcp.pop %v1882
    %v1947 = vrcp.pop %v1883
    %v1948 = vrcp.pop %v1884
    %v1949 = vrcp.pop %v1885
    %v1950 = vrcp.pop %v1886
    %v1951 = vrcp.pop %v1887
    %v1952 = vrcp.pop %v1888
    %v1953 = vrcp.pop %v1889
    %v1954 = vrcp.pop %v1890
    %v1955 = vrcp.pop %v1891
    %v1956 = vrcp.pop %v1892
    %v1957 = vrcp.pop %v1893
    %v1958 = vrcp.pop %v1894
    %v1959 = vrcp.pop %v1895
    %v1960 = vrcp.pop %v1896
    %v1961 = vrcp.pop %v1897
    %v1962 = vrcp.pop %v1898
    %v1963 = vrcp.pop %v1899
    %v1964 = vrcp.pop %v1900
    %v1965 = vrcp.pop %v1901
    %v1966 = vrcp.pop %v1902
    %v1967 = vrcp.pop %v1903
    %v1968 = vrcp.pop %v1904
    %v1969 = vrcp.pop %v1905
    %v1970 = vrcp.pop %v1906
    %v1971 = vrcp.pop %v1907
    %v1972 = vrcp.pop %v1908
    %v1973 = vrcp.pop %v1909
    %v1974 = vrcp.pop %v1910
    %1975 = vst [vmem:[#allocation8] sm:$0xff] %v1911
    %1976 = vst [vmem:[#allocation8 + $0x8] sm:$0xff] %v1912
    %1977 = vst [vmem:[#allocation8 + $0x10] sm:$0xff] %v1913
    %1978 = vst [vmem:[#allocation8 + $0x18] sm:$0xff] %v1914
    %1979 = vst [vmem:[#allocation8 + $0x20] sm:$0xff] %v1915
    %1980 = vst [vmem:[#allocation8 + $0x28] sm:$0xff] %v1916
    %1981 = vst [vmem:[#allocation8 + $0x30] sm:$0xff] %v1917
    %1982 = vst [vmem:[#allocation8 + $0x38] sm:$0xff] %v1918
    %1983 = vst [vmem:[#allocation8 + $0x40] sm:$0xff] %v1919
    %1984 = vst [vmem:[#allocation8 + $0x48] sm:$0xff] %v1920
    %1985 = vst [vmem:[#allocation8 + $0x50] sm:$0xff] %v1921
    %1986 = vst [vmem:[#allocation8 + $0x58] sm:$0xff] %v1922
    %1987 = vst [vmem:[#allocation8 + $0x60] sm:$0xff] %v1923
    %1988 = vst [vmem:[#allocation8 + $0x68] sm:$0xff] %v1924
    %1989 = vst [vmem:[#allocation8 + $0x70] sm:$0xff] %v1925
    %1990 = vst [vmem:[#allocation8 + $0x78] sm:$0xff] %v1926
    %1991 = vst [vmem:[#allocation8 + $0x80] sm:$0xff] %v1927
    %1992 = vst [vmem:[#allocation8 + $0x88] sm:$0xff] %v1928
    %1993 = vst [vmem:[#allocation8 + $0x90] sm:$0xff] %v1929
    %1994 = vst [vmem:[#allocation8 + $0x98] sm:$0xff] %v1930
    %1995 = vst [vmem:[#allocation8 + $0xa0] sm:$0xff] %v1931
    %1996 = vst [vmem:[#allocation8 + $0xa8] sm:$0xff] %v1932
    %1997 = vst [vmem:[#allocation8 + $0xb0] sm:$0xff] %v1933
    %1998 = vst [vmem:[#allocation8 + $0xb8] sm:$0xff] %v1934
    %1999 = vst [vmem:[#allocation8 + $0xc0] sm:$0xff] %v1935
    %2000 = vst [vmem:[#allocation8 + $0xc8] sm:$0xff] %v1936
    %2001 = vst [vmem:[#allocation8 + $0xd0] sm:$0xff] %v1937
    %2002 = vst [vmem:[#allocation8 + $0xd8] sm:$0xff] %v1938
    %2003 = vst [vmem:[#allocation8 + $0xe0] sm:$0xff] %v1939
    %2004 = vst [vmem:[#allocation8 + $0xe8] sm:$0xff] %v1940
    %2005 = vst [vmem:[#allocation8 + $0xf0] sm:$0xff] %v1941
    %2006 = vst [vmem:[#allocation8 + $0xf8] sm:$0xff] %v1942
    %2007 = vst [vmem:[#allocation8 + $0x100] sm:$0xff] %v1943
    %2008 = vst [vmem:[#allocation8 + $0x108] sm:$0xff] %v1944
    %2009 = vst [vmem:[#allocation8 + $0x110] sm:$0xff] %v1945
    %2010 = vst [vmem:[#allocation8 + $0x118] sm:$0xff] %v1946
    %2011 = vst [vmem:[#allocation8 + $0x120] sm:$0xff] %v1947
    %2012 = vst [vmem:[#allocation8 + $0x128] sm:$0xff] %v1948
    %2013 = vst [vmem:[#allocation8 + $0x130] sm:$0xff] %v1949
    %2014 = vst [vmem:[#allocation8 + $0x138] sm:$0xff] %v1950
    %2015 = vst [vmem:[#allocation8 + $0x140] sm:$0xff] %v1951
    %2016 = vst [vmem:[#allocation8 + $0x148] sm:$0xff] %v1952
    %2017 = vst [vmem:[#allocation8 + $0x150] sm:$0xff] %v1953
    %2018 = vst [vmem:[#allocation8 + $0x158] sm:$0xff] %v1954
    %2019 = vst [vmem:[#allocation8 + $0x160] sm:$0xff] %v1955
    %2020 = vst [vmem:[#allocation8 + $0x168] sm:$0xff] %v1956
    %2021 = vst [vmem:[#allocation8 + $0x170] sm:$0xff] %v1957
    %2022 = vst [vmem:[#allocation8 + $0x178] sm:$0xff] %v1958
    %2023 = vst [vmem:[#allocation8 + $0x180] sm:$0xff] %v1959
    %2024 = vst [vmem:[#allocation8 + $0x188] sm:$0xff] %v1960
    %2025 = vst [vmem:[#allocation8 + $0x190] sm:$0xff] %v1961
    %2026 = vst [vmem:[#allocation8 + $0x198] sm:$0xff] %v1962
    %2027 = vst [vmem:[#allocation8 + $0x1a0] sm:$0xff] %v1963
    %2028 = vst [vmem:[#allocation8 + $0x1a8] sm:$0xff] %v1964
    %2029 = vst [vmem:[#allocation8 + $0x1b0] sm:$0xff] %v1965
    %2030 = vst [vmem:[#allocation8 + $0x1b8] sm:$0xff] %v1966
    %2031 = vst [vmem:[#allocation8 + $0x1c0] sm:$0xff] %v1967
    %2032 = vst [vmem:[#allocation8 + $0x1c8] sm:$0xff] %v1968
    %2033 = vst [vmem:[#allocation8 + $0x1d0] sm:$0xff] %v1969
    %2034 = vst [vmem:[#allocation8 + $0x1d8] sm:$0xff] %v1970
    %2035 = vst [vmem:[#allocation8 + $0x1e0] sm:$0xff] %v1971
    %2036 = vst [vmem:[#allocation8 + $0x1e8] sm:$0xff] %v1972
    %2037 = vst [vmem:[#allocation8 + $0x1f0] sm:$0xff] %v1973
    %2038 = vst [vmem:[#allocation8 + $0x1f8] sm:$0xff] %v1974
    %2039 = vst [vmem:[#allocation9] sm:$0xff] 0.0
    %2040 = vst [vmem:[#allocation9 + $0x8] sm:$0xff] 0.0
    %2041 = vst [vmem:[#allocation9 + $0x10] sm:$0xff] 0.0
    %2042 = vst [vmem:[#allocation9 + $0x18] sm:$0xff] 0.0
    %2043 = vst [vmem:[#allocation9 + $0x20] sm:$0xff] 0.0
    %2044 = vst [vmem:[#allocation9 + $0x28] sm:$0xff] 0.0
    %2045 = vst [vmem:[#allocation9 + $0x30] sm:$0xff] 0.0
    %2046 = vst [vmem:[#allocation9 + $0x38] sm:$0xff] 0.0
    %2047 = vst [vmem:[#allocation9 + $0x40] sm:$0xff] 0.0
    %2048 = vst [vmem:[#allocation9 + $0x48] sm:$0xff] 0.0
    %2049 = vst [vmem:[#allocation9 + $0x50] sm:$0xff] 0.0
    %2050 = vst [vmem:[#allocation9 + $0x58] sm:$0xff] 0.0
    %2051 = vst [vmem:[#allocation9 + $0x60] sm:$0xff] 0.0
    %2052 = vst [vmem:[#allocation9 + $0x68] sm:$0xff] 0.0
    %2053 = vst [vmem:[#allocation9 + $0x70] sm:$0xff] 0.0
    %2054 = vst [vmem:[#allocation9 + $0x78] sm:$0xff] 0.0
    %2055 = vst [vmem:[#allocation9 + $0x80] sm:$0xff] 0.0
    %2056 = vst [vmem:[#allocation9 + $0x88] sm:$0xff] 0.0
    %2057 = vst [vmem:[#allocation9 + $0x90] sm:$0xff] 0.0
    %2058 = vst [vmem:[#allocation9 + $0x98] sm:$0xff] 0.0
    %2059 = vst [vmem:[#allocation9 + $0xa0] sm:$0xff] 0.0
    %2060 = vst [vmem:[#allocation9 + $0xa8] sm:$0xff] 0.0
    %2061 = vst [vmem:[#allocation9 + $0xb0] sm:$0xff] 0.0
    %2062 = vst [vmem:[#allocation9 + $0xb8] sm:$0xff] 0.0
    %2063 = vst [vmem:[#allocation9 + $0xc0] sm:$0xff] 0.0
    %2064 = vst [vmem:[#allocation9 + $0xc8] sm:$0xff] 0.0
    %2065 = vst [vmem:[#allocation9 + $0xd0] sm:$0xff] 0.0
    %2066 = vst [vmem:[#allocation9 + $0xd8] sm:$0xff] 0.0
    %2067 = vst [vmem:[#allocation9 + $0xe0] sm:$0xff] 0.0
    %2068 = vst [vmem:[#allocation9 + $0xe8] sm:$0xff] 0.0
    %2069 = vst [vmem:[#allocation9 + $0xf0] sm:$0xff] 0.0
    %2070 = vst [vmem:[#allocation9 + $0xf8] sm:$0xff] 0.0
    %vm2071 = vcmask 261120
    %2072 = vst.msk [vmem:[#allocation9] sm:$0xff] %vm2071, %v549
    %2073 = vst.msk [vmem:[#allocation9 + $0x8] sm:$0xff] %vm2071, %v554
    %2074 = vst.msk [vmem:[#allocation9 + $0x10] sm:$0xff] %vm2071, %v559
    %2075 = vst.msk [vmem:[#allocation9 + $0x18] sm:$0xff] %vm2071, %v564
    %2076 = vst.msk [vmem:[#allocation9 + $0x20] sm:$0xff] %vm2071, %v569
    %2077 = vst.msk [vmem:[#allocation9 + $0x28] sm:$0xff] %vm2071, %v574
    %2078 = vst.msk [vmem:[#allocation9 + $0x30] sm:$0xff] %vm2071, %v579
    %2079 = vst.msk [vmem:[#allocation9 + $0x38] sm:$0xff] %vm2071, %v584
    %2080 = vst.msk [vmem:[#allocation9 + $0x40] sm:$0xff] %vm2071, %v589
    %2081 = vst.msk [vmem:[#allocation9 + $0x48] sm:$0xff] %vm2071, %v594
    %2082 = vst.msk [vmem:[#allocation9 + $0x50] sm:$0xff] %vm2071, %v599
    %2083 = vst.msk [vmem:[#allocation9 + $0x58] sm:$0xff] %vm2071, %v604
    %2084 = vst.msk [vmem:[#allocation9 + $0x60] sm:$0xff] %vm2071, %v609
    %2085 = vst.msk [vmem:[#allocation9 + $0x68] sm:$0xff] %vm2071, %v614
    %2086 = vst.msk [vmem:[#allocation9 + $0x70] sm:$0xff] %vm2071, %v619
    %2087 = vst.msk [vmem:[#allocation9 + $0x78] sm:$0xff] %vm2071, %v624
    %2088 = vst.msk [vmem:[#allocation9 + $0x80] sm:$0xff] %vm2071, %v629
    %2089 = vst.msk [vmem:[#allocation9 + $0x88] sm:$0xff] %vm2071, %v634
    %2090 = vst.msk [vmem:[#allocation9 + $0x90] sm:$0xff] %vm2071, %v639
    %2091 = vst.msk [vmem:[#allocation9 + $0x98] sm:$0xff] %vm2071, %v644
    %2092 = vst.msk [vmem:[#allocation9 + $0xa0] sm:$0xff] %vm2071, %v649
    %2093 = vst.msk [vmem:[#allocation9 + $0xa8] sm:$0xff] %vm2071, %v654
    %2094 = vst.msk [vmem:[#allocation9 + $0xb0] sm:$0xff] %vm2071, %v659
    %2095 = vst.msk [vmem:[#allocation9 + $0xb8] sm:$0xff] %vm2071, %v664
    %2096 = vst.msk [vmem:[#allocation9 + $0xc0] sm:$0xff] %vm2071, %v669
    %2097 = vst.msk [vmem:[#allocation9 + $0xc8] sm:$0xff] %vm2071, %v674
    %2098 = vst.msk [vmem:[#allocation9 + $0xd0] sm:$0xff] %vm2071, %v679
    %2099 = vst.msk [vmem:[#allocation9 + $0xd8] sm:$0xff] %vm2071, %v684
    %2100 = vst.msk [vmem:[#allocation9 + $0xe0] sm:$0xff] %vm2071, %v689
    %2101 = vst.msk [vmem:[#allocation9 + $0xe8] sm:$0xff] %vm2071, %v694
    %2102 = vst.msk [vmem:[#allocation9 + $0xf0] sm:$0xff] %vm2071, %v699
    %2103 = vst.msk [vmem:[#allocation9 + $0xf8] sm:$0xff] %vm2071, %v704
    %2104 = vrot.lane.b32.xlu0 %v963, 32
    %v2105 = vpop.permute.xlu0 %2104
    %2106 = vrot.lane.b32.xlu0 %v964, 32
    %v2107 = vpop.permute.xlu0 %2106
    %2108 = vrot.lane.b32.xlu0 %v965, 32
    %v2109 = vpop.permute.xlu0 %2108
    %2110 = vrot.lane.b32.xlu0 %v966, 32
    %v2111 = vpop.permute.xlu0 %2110
    %2112 = vrot.lane.b32.xlu0 %v967, 32
    %v2113 = vpop.permute.xlu0 %2112
    %2114 = vrot.lane.b32.xlu0 %v968, 32
    %v2115 = vpop.permute.xlu0 %2114
    %2116 = vrot.lane.b32.xlu0 %v969, 32
    %v2117 = vpop.permute.xlu0 %2116
    %2118 = vrot.lane.b32.xlu0 %v970, 32
    %v2119 = vpop.permute.xlu0 %2118
    %2120 = vrot.lane.b32.xlu0 %v971, 32
    %v2121 = vpop.permute.xlu0 %2120
    %2122 = vrot.lane.b32.xlu0 %v972, 32
    %v2123 = vpop.permute.xlu0 %2122
    %2124 = vrot.lane.b32.xlu0 %v973, 32
    %v2125 = vpop.permute.xlu0 %2124
    %2126 = vrot.lane.b32.xlu0 %v974, 32
    %v2127 = vpop.permute.xlu0 %2126
    %2128 = vrot.lane.b32.xlu0 %v975, 32
    %v2129 = vpop.permute.xlu0 %2128
    %2130 = vrot.lane.b32.xlu0 %v976, 32
    %v2131 = vpop.permute.xlu0 %2130
    %2132 = vrot.lane.b32.xlu0 %v977, 32
    %v2133 = vpop.permute.xlu0 %2132
    %2134 = vrot.lane.b32.xlu0 %v978, 32
    %v2135 = vpop.permute.xlu0 %2134
    %2136 = vrot.lane.b32.xlu0 %v979, 32
    %v2137 = vpop.permute.xlu0 %2136
    %2138 = vrot.lane.b32.xlu0 %v980, 32
    %v2139 = vpop.permute.xlu0 %2138
    %2140 = vrot.lane.b32.xlu0 %v981, 32
    %v2141 = vpop.permute.xlu0 %2140
    %2142 = vrot.lane.b32.xlu0 %v982, 32
    %v2143 = vpop.permute.xlu0 %2142
    %2144 = vrot.lane.b32.xlu0 %v983, 32
    %v2145 = vpop.permute.xlu0 %2144
    %2146 = vrot.lane.b32.xlu0 %v984, 32
    %v2147 = vpop.permute.xlu0 %2146
    %2148 = vrot.lane.b32.xlu0 %v985, 32
    %v2149 = vpop.permute.xlu0 %2148
    %2150 = vrot.lane.b32.xlu0 %v986, 32
    %v2151 = vpop.permute.xlu0 %2150
    %2152 = vrot.lane.b32.xlu0 %v987, 32
    %v2153 = vpop.permute.xlu0 %2152
    %2154 = vrot.lane.b32.xlu0 %v988, 32
    %v2155 = vpop.permute.xlu0 %2154
    %2156 = vrot.lane.b32.xlu0 %v989, 32
    %v2157 = vpop.permute.xlu0 %2156
    %2158 = vrot.lane.b32.xlu0 %v990, 32
    %v2159 = vpop.permute.xlu0 %2158
    %2160 = vrot.lane.b32.xlu0 %v991, 32
    %v2161 = vpop.permute.xlu0 %2160
    %2162 = vrot.lane.b32.xlu0 %v992, 32
    %v2163 = vpop.permute.xlu0 %2162
    %2164 = vrot.lane.b32.xlu0 %v993, 32
    %v2165 = vpop.permute.xlu0 %2164
    %2166 = vrot.lane.b32.xlu0 %v994, 32
    %v2167 = vpop.permute.xlu0 %2166
    %vm2200 = vcmask 392448
    %2201 = vst.msk [vmem:[#allocation9] sm:$0xff] %vm2200, %v2105
    %2202 = vst.msk [vmem:[#allocation9 + $0x8] sm:$0xff] %vm2200, %v2107
    %2203 = vst.msk [vmem:[#allocation9 + $0x10] sm:$0xff] %vm2200, %v2109
    %2204 = vst.msk [vmem:[#allocation9 + $0x18] sm:$0xff] %vm2200, %v2111
    %2205 = vst.msk [vmem:[#allocation9 + $0x20] sm:$0xff] %vm2200, %v2113
    %2206 = vst.msk [vmem:[#allocation9 + $0x28] sm:$0xff] %vm2200, %v2115
    %2207 = vst.msk [vmem:[#allocation9 + $0x30] sm:$0xff] %vm2200, %v2117
    %2208 = vst.msk [vmem:[#allocation9 + $0x38] sm:$0xff] %vm2200, %v2119
    %2209 = vst.msk [vmem:[#allocation9 + $0x40] sm:$0xff] %vm2200, %v2121
    %2210 = vst.msk [vmem:[#allocation9 + $0x48] sm:$0xff] %vm2200, %v2123
    %2211 = vst.msk [vmem:[#allocation9 + $0x50] sm:$0xff] %vm2200, %v2125
    %2212 = vst.msk [vmem:[#allocation9 + $0x58] sm:$0xff] %vm2200, %v2127
    %2213 = vst.msk [vmem:[#allocation9 + $0x60] sm:$0xff] %vm2200, %v2129
    %2214 = vst.msk [vmem:[#allocation9 + $0x68] sm:$0xff] %vm2200, %v2131
    %2215 = vst.msk [vmem:[#allocation9 + $0x70] sm:$0xff] %vm2200, %v2133
    %2216 = vst.msk [vmem:[#allocation9 + $0x78] sm:$0xff] %vm2200, %v2135
    %2217 = vst.msk [vmem:[#allocation9 + $0x80] sm:$0xff] %vm2200, %v2137
    %2218 = vst.msk [vmem:[#allocation9 + $0x88] sm:$0xff] %vm2200, %v2139
    %2219 = vst.msk [vmem:[#allocation9 + $0x90] sm:$0xff] %vm2200, %v2141
    %2220 = vst.msk [vmem:[#allocation9 + $0x98] sm:$0xff] %vm2200, %v2143
    %2221 = vst.msk [vmem:[#allocation9 + $0xa0] sm:$0xff] %vm2200, %v2145
    %2222 = vst.msk [vmem:[#allocation9 + $0xa8] sm:$0xff] %vm2200, %v2147
    %2223 = vst.msk [vmem:[#allocation9 + $0xb0] sm:$0xff] %vm2200, %v2149
    %2224 = vst.msk [vmem:[#allocation9 + $0xb8] sm:$0xff] %vm2200, %v2151
    %2225 = vst.msk [vmem:[#allocation9 + $0xc0] sm:$0xff] %vm2200, %v2153
    %2226 = vst.msk [vmem:[#allocation9 + $0xc8] sm:$0xff] %vm2200, %v2155
    %2227 = vst.msk [vmem:[#allocation9 + $0xd0] sm:$0xff] %vm2200, %v2157
    %2228 = vst.msk [vmem:[#allocation9 + $0xd8] sm:$0xff] %vm2200, %v2159
    %2229 = vst.msk [vmem:[#allocation9 + $0xe0] sm:$0xff] %vm2200, %v2161
    %2230 = vst.msk [vmem:[#allocation9 + $0xe8] sm:$0xff] %vm2200, %v2163
    %2231 = vst.msk [vmem:[#allocation9 + $0xf0] sm:$0xff] %vm2200, %v2165
    %2232 = vst.msk [vmem:[#allocation9 + $0xf8] sm:$0xff] %vm2200, %v2167
    // Predicated region
    $region38: #{tpu_custom_call.1} parent=1 // pred_check
      _
    $region39: #{tpu_custom_call.1} parent=1 // pred_check_branch
      %2234 = sbr.rel (0) target = $region41
    $region40: #{tpu_custom_call.1} parent=1 // pred_region
      %s2236 = ssub.s32 8192, 8192
      %2237 = vsyncadd [#allocation4], %s2236
      %s2238 = sshll.u32 [#allocation8], 4
      %s2239 = int_to_ptr.vmem [resolvable:$true] %s2238
      %2244 = dma.vmem_to_hbm [thread:$0]  %s2239, 8192, %s6, [#allocation4], 256, 256, 16
    $region41: #{tpu_custom_call.1} parent=1 // pred_fallthru
      _
    // Predicated region
    $region42: #{tpu_custom_call.1} parent=1 // pred_check
      _
    $region43: #{tpu_custom_call.1} parent=1 // pred_check_branch
      %2246 = sbr.rel (0) target = $region45
    $region44: #{tpu_custom_call.1} parent=1 // pred_region
      %s2248 = ssub.s32 4096, 4096
      %2249 = vsyncadd [#allocation10], %s2248
      %s2250 = sshll.u32 [#allocation9], 4
      %s2251 = int_to_ptr.vmem [resolvable:$true] %s2250
      %2256 = dma.vmem_to_hbm [thread:$0]  %s2251, 4096, %s7, [#allocation10], 128, 128, 8
    $region45: #{tpu_custom_call.1} parent=1 // pred_fallthru
      _
    // Predicated region
    $region46: #{tpu_custom_call.1} parent=1 // pred_check
      _
    $region47: #{tpu_custom_call.1} parent=1 // pred_check_branch
      %2258 = sbr.rel (0) target = $region49
    $region48: #{tpu_custom_call.1} parent=1 // pred_region
      %2259 = dma.done [#allocation4], 8192
    $region49: #{tpu_custom_call.1} parent=1 // pred_fallthru
      _
    // Predicated region
    $region50: #{tpu_custom_call.1} parent=1 // pred_check
      _
    $region51: #{tpu_custom_call.1} parent=1 // pred_check_branch
      %2261 = sbr.rel (0) target = $region53
    $region52: #{tpu_custom_call.1} parent=1 // pred_region
      %2262 = dma.done [#allocation10], 4096
    $region53: #{tpu_custom_call.1} parent=1 // pred_fallthru
      _
    %2263 = vsyncpa [#allocation3], 1
    %2264 = vsyncpa [#allocation6], 1
    %2265 = vsyncpa [#allocation4], 1
    %2266 = vsyncpa [#allocation10], 1

</llo_original>
